<compile_context>
chip_gen: v5e
topology: v5e:2x2
jax: 0.10.0
libtpu: 0.0.40
codegen_flags: <defaults>
</compile_context>

<pallas_src>
import functools

import jax
import jax.numpy as jnp
from jax import lax
from jax.experimental import pallas as pl
from jax.experimental.pallas import tpu as pltpu


# ------------- Kernel 1: linear projection  XW = X @ W  (f32 + bf16) --------
def proj_kernel(x_ref, w_ref, xw_f32_ref, xw_bf16_ref):
    xw = jnp.dot(x_ref[...], w_ref[...], preferred_element_type=jnp.float32)
    xw_f32_ref[...] = xw
    xw_bf16_ref[...] = xw.astype(jnp.bfloat16)


# ------------- Kernel 2: edge aggregation  Xe = H_mean @ XW  (bf16 out) -----
# grid = (E tiles [parallel], N tiles [arbitrary reduction])
def edge_agg_kernel(hm_ref, xwb_ref, xe_ref, acc_ref):
    n = pl.program_id(1)

    @pl.when(n == 0)
    def _():
        acc_ref[...] = jnp.zeros_like(acc_ref)

    acc_ref[...] += jnp.dot(hm_ref[...], xwb_ref[...],
                            preferred_element_type=jnp.float32)

    @pl.when(n == pl.num_programs(1) - 1)
    def _():
        xe_ref[...] = acc_ref[...].astype(xe_ref.dtype)


# ------- Kernel 3: vertex aggregation + eps residual + row L2-normalize -----
# grid = (N tiles [parallel], E tiles [arbitrary reduction])
def vertex_agg_kernel(eps_ref, ht_ref, xe_ref, xw_ref, out_ref, acc_ref):
    e = pl.program_id(1)

    @pl.when(e == 0)
    def _():
        acc_ref[...] = jnp.zeros_like(acc_ref)

    acc_ref[...] += jnp.dot(ht_ref[...], xe_ref[...],
                            preferred_element_type=jnp.float32)

    @pl.when(e == pl.num_programs(1) - 1)
    def _():
        y = (1.0 + eps_ref[0]) * xw_ref[...] + acc_ref[...]          # f32 epilogue
        ss = jnp.sum(y * y, axis=1, keepdims=True)
        scale = jnp.where(ss > 0.0, lax.rsqrt(ss), 0.0)              # EUP rsqrt
        out_ref[...] = (y * scale).astype(out_ref.dtype)


def _pad_to(x, axis, multiple):
    pad = (-x.shape[axis]) % multiple
    if pad == 0:
        return x
    widths = [(0, 0)] * x.ndim
    widths[axis] = (0, pad)
    return jnp.pad(x, widths)


@functools.partial(jax.jit, static_argnums=(4,),
                   static_argnames=("tile_n", "tile_e"))
def unigin_conv(x, w, vertex, edges, num_edges, eps, *, tile_n=256, tile_e=256):
    """UniGINConv forward (first_aggregate='mean', use_norm=True)."""
    N, c_in = x.shape
    C = w.shape[1]

    # ----- wrapper-side plumbing (plain JAX glue, static per graph) -----
    # Dense incidence H[e, v] built from (vertex, edges) pairs.
    # TODO(synk): for very large sparse hypergraphs replace the dense-incidence
    # matmuls with a scalar-prefetch gather/scatter kernel.
    H = jnp.zeros((num_edges, N), jnp.float32).at[edges, vertex].add(1.0)
    cnt = jnp.sum(H, axis=1, keepdims=True)
    inv_cnt = jnp.where(cnt > 0.0, 1.0 / cnt, 0.0)
    h_mean = (H * inv_cnt).astype(jnp.bfloat16)          # [E, N], mean pre-folded
    h_t = H.T.astype(jnp.bfloat16)                       # [N, E], pre-transposed (0/1, lossless)

    # Lane-dense output: pad heads*out_channels to a multiple of 128 (zero cols).
    c_pad = max(128, ((C + 127) // 128) * 128)
    w_p = jnp.pad(w, ((0, 0), (0, c_pad - C))).astype(jnp.bfloat16)
    x_b = x.astype(jnp.bfloat16)

    # Pad N / E to tile multiples (zero rows/cols are inert for this op).
    x_b = _pad_to(x_b, 0, tile_n)
    h_mean = _pad_to(_pad_to(h_mean, 0, tile_e), 1, tile_n)
    h_t = _pad_to(_pad_to(h_t, 0, tile_n), 1, tile_e)
    n_p = x_b.shape[0]
    e_p = h_mean.shape[0]

    cp = lambda sem: pltpu.CompilerParams(dimension_semantics=sem,
                                          vmem_limit_bytes=64 * 1024 * 1024)

    # ----- kernel 1: XW = X @ W   (emit f32 for residual + bf16 for matmuls) --
    xw_f32, xw_b16 = pl.pallas_call(
        proj_kernel,
        out_shape=(jax.ShapeDtypeStruct((n_p, c_pad), jnp.float32),
                   jax.ShapeDtypeStruct((n_p, c_pad), jnp.bfloat16)),
        grid=(n_p // tile_n,),
        in_specs=[
            pl.BlockSpec((tile_n, c_in), lambda i: (i, 0)),
            pl.BlockSpec((c_in, c_pad), lambda i: (0, 0)),
        ],
        out_specs=[pl.BlockSpec((tile_n, c_pad), lambda i: (i, 0)),
                   pl.BlockSpec((tile_n, c_pad), lambda i: (i, 0))],
        compiler_params=cp(("parallel",)),
        cost_estimate=pl.CostEstimate(
            flops=2 * n_p * c_in * c_pad, transcendentals=0,
            bytes_accessed=x_b.size * 2 + w_p.size * 2 + n_p * c_pad * 6),
    )(x_b, w_p)

    # ----- kernel 2: Xe = H_mean @ XW  (reduce over node tiles, bf16 out) -----
    xe = pl.pallas_call(
        edge_agg_kernel,
        out_shape=jax.ShapeDtypeStruct((e_p, c_pad), jnp.bfloat16),
        grid=(e_p // tile_e, n_p // tile_n),
        in_specs=[
            pl.BlockSpec((tile_e, tile_n), lambda e, n: (e, n)),
            pl.BlockSpec((tile_n, c_pad), lambda e, n: (n, 0)),
        ],
        out_specs=pl.BlockSpec((tile_e, c_pad), lambda e, n: (e, 0)),
        scratch_shapes=[pltpu.VMEM((tile_e, c_pad), jnp.float32)],
        compiler_params=cp(("parallel", "arbitrary")),
        cost_estimate=pl.CostEstimate(
            flops=2 * e_p * n_p * c_pad, transcendentals=0,
            bytes_accessed=e_p * n_p * 2 + n_p * c_pad * 2 + e_p * c_pad * 2),
    )(h_mean, xw_b16)

    # ----- kernel 3: Xv = H^T @ Xe, residual + L2 norm (reduce over edge tiles)
    y = pl.pallas_call(
        vertex_agg_kernel,
        out_shape=jax.ShapeDtypeStruct((n_p, c_pad), jnp.float32),
        grid=(n_p // tile_n, e_p // tile_e),
        in_specs=[
            pl.BlockSpec(memory_space=pltpu.MemorySpace.SMEM),        # eps
            pl.BlockSpec((tile_n, tile_e), lambda n, e: (n, e)),      # H^T
            pl.BlockSpec((tile_e, c_pad), lambda n, e: (e, 0)),       # Xe (bf16)
            pl.BlockSpec((tile_n, c_pad), lambda n, e: (n, 0)),       # XW (f32)
        ],
        out_specs=pl.BlockSpec((tile_n, c_pad), lambda n, e: (n, 0)),
        scratch_shapes=[pltpu.VMEM((tile_n, c_pad), jnp.float32)],
        compiler_params=cp(("parallel", "arbitrary")),
        cost_estimate=pl.CostEstimate(
            flops=2 * n_p * e_p * c_pad + 4 * n_p * c_pad,
            transcendentals=n_p,
            bytes_accessed=n_p * e_p * 2 + e_p * c_pad * 2
                           + 2 * n_p * c_pad * 4),
    )(eps, h_t, xe, xw_f32)

    return y[:N, :C]


def reference(x, w, vertex, edges, num_edges, eps):
    """Pure-JAX reference matching the PyTorch scatter semantics and the
    kernel's precision choices (bf16 MXU operands, f32 accumulate/epilogue)."""
    N = x.shape[0]
    f32 = jnp.float32
    xw = x.astype(jnp.bfloat16).astype(f32) @ w.astype(jnp.bfloat16).astype(f32)
    H = jnp.zeros((num_edges, N), f32).at[edges, vertex].add(1.0)
    cnt = jnp.sum(H, axis=1, keepdims=True)
    inv_cnt = jnp.where(cnt > 0.0, 1.0 / cnt, 0.0)
    hm = (H * inv_cnt).astype(jnp.bfloat16).astype(f32)
    xe = hm @ xw.astype(jnp.bfloat16).astype(f32)
    ht = H.T.astype(jnp.bfloat16).astype(f32)
    xv = ht @ xe.astype(jnp.bfloat16).astype(f32)
    y = (1.0 + eps[0]) * xw + xv
    rn = jnp.sqrt(jnp.sum(y * y, axis=1, keepdims=True))
    scale = jnp.where(rn > 0.0, 1.0 / rn, 0.0)
    return y * scale


if __name__ == "__main__":
    key = jax.random.PRNGKey(0)
    k_x, k_w = jax.random.split(key)

    # Small shapes consistent with the module (but big enough to exercise the grid).
    N = 256                   # number of nodes
    in_channels = 32
    heads = 8
    out_channels = 8          # heads * out_channels = 64 (lane-padded to 128)
    C = heads * out_channels
    num_edges = 256
    verts_per_edge = 4

    # Deterministic params (nn.Linear(in, heads*out, bias=False), eps = 0.0)
    bound = 1.0 / (in_channels ** 0.5)
    W = jax.random.uniform(k_w, (in_channels, C), jnp.float32, -bound, bound)
    eps = jnp.array([0.0], dtype=jnp.float32)
    X = jax.random.normal(k_x, (N, in_channels), jnp.float32)

    # Synthetic hypergraph incidence pairs (vertex[i], edges[i]).
    vertex = jnp.array(
        [(e * 7 + j * 13) % N for e in range(num_edges) for j in range(verts_per_edge)],
        dtype=jnp.int32)
    edges = jnp.array(
        [e for e in range(num_edges) for _ in range(verts_per_edge)],
        dtype=jnp.int32)

    out = unigin_conv(X, W, vertex, edges, num_edges, eps, tile_n=128, tile_e=128)
    out = jax.block_until_ready(out)

    ref = reference(X, W, vertex, edges, num_edges, eps)
    assert out.shape == (N, C)
    max_err = float(jnp.max(jnp.abs(out - ref)))
    assert jnp.allclose(out, ref, atol=1e-4, rtol=1e-3), f"mismatch vs reference: {max_err}"

    print("KERNEL_OK")
</pallas_src>

<mosaic_0001>
module attributes {stable_mosaic.version = 11 : i64} {
  func.func @edge_agg_kernel(%arg0: i32, %arg1: i32, %arg2: memref<128x128xbf16, #tpu.memory_space<vmem>>, %arg3: memref<128x128xbf16, #tpu.memory_space<vmem>>, %arg4: memref<128x128xbf16, #tpu.memory_space<vmem>>, %arg5: memref<128x128xf32, #tpu.memory_space<vmem>>) attributes {dimension_semantics = [#tpu.dimension_semantics<parallel>, #tpu.dimension_semantics<arbitrary>], iteration_bounds = array<i64: 2, 2>, scalar_prefetch = 0 : i64, scratch_operands = 1 : i64, tpu.core_type = #tpu.core_type<tc>, window_params = [{transform_indices = @transform_0, window_bounds = array<i64: 128, 128>}, {transform_indices = @transform_1, window_bounds = array<i64: 128, 128>}, {transform_indices = @transform_2, window_bounds = array<i64: 128, 128>}]} {
    %c0_i32 = arith.constant 0 : i32
    %0 = arith.cmpi eq, %arg1, %c0_i32 : i32
    %1 = arith.extui %0 : i1 to i32
    %c0_i32_0 = arith.constant 0 : i32
    %2 = arith.cmpi ne, %1, %c0_i32_0 : i32
    scf.if %2 {
      %cst_9 = arith.constant 0.000000e+00 : f32
      %12 = vector.broadcast %cst_9 : f32 to vector<128x128xf32>
      %c0_10 = arith.constant 0 : index
      %c0_11 = arith.constant 0 : index
      %13 = vector.load %arg5[%c0_10, %c0_11] : memref<128x128xf32, #tpu.memory_space<vmem>>, vector<128x128xf32>
      tpu.vector_store %arg5[%c0_10, %c0_11], %12 {strides = array<i32>} : memref<128x128xf32, #tpu.memory_space<vmem>>, vector<128x128xf32>,
    } else {
    }
    %c0 = arith.constant 0 : index
    %c0_1 = arith.constant 0 : index
    %3 = vector.load %arg5[%c0, %c0_1] : memref<128x128xf32, #tpu.memory_space<vmem>>, vector<128x128xf32>
    %c0_2 = arith.constant 0 : index
    %c0_3 = arith.constant 0 : index
    %4 = vector.load %arg2[%c0_2, %c0_3] : memref<128x128xbf16, #tpu.memory_space<vmem>>, vector<128x128xbf16>
    %c0_4 = arith.constant 0 : index
    %c0_5 = arith.constant 0 : index
    %5 = vector.load %arg3[%c0_4, %c0_5] : memref<128x128xbf16, #tpu.memory_space<vmem>>, vector<128x128xbf16>
    %cst = arith.constant dense<0.000000e+00> : vector<128x128xf32>
    %6 = tpu.matmul %4, %5, %cst {dimension_numbers = #tpu.dot_dimension_numbers<[1], [0], [0], [1], [0, 0, 1, 1], [], []>} : vector<128x128xbf16>, vector<128x128xbf16>, vector<128x128xf32> -> vector<128x128xf32>
    %7 = arith.addf %3, %6 : vector<128x128xf32>
    %c0_6 = arith.constant 0 : index
    %c0_7 = arith.constant 0 : index
    %8 = vector.load %arg5[%c0_6, %c0_7] : memref<128x128xf32, #tpu.memory_space<vmem>>, vector<128x128xf32>
    tpu.vector_store %arg5[%c0_6, %c0_7], %7 {strides = array<i32>} : memref<128x128xf32, #tpu.memory_space<vmem>>, vector<128x128xf32>,
    %c1_i32 = arith.constant 1 : i32
    %9 = arith.cmpi eq, %arg1, %c1_i32 : i32
    %10 = arith.extui %9 : i1 to i32
    %c0_i32_8 = arith.constant 0 : i32
    %11 = arith.cmpi ne, %10, %c0_i32_8 : i32
    scf.if %11 {
      %c0_9 = arith.constant 0 : index
      %c0_10 = arith.constant 0 : index
      %12 = vector.load %arg5[%c0_9, %c0_10] : memref<128x128xf32, #tpu.memory_space<vmem>>, vector<128x128xf32>
      %13 = arith.truncf %12 : vector<128x128xf32> to vector<128x128xbf16>
      %c0_11 = arith.constant 0 : index
      %c0_12 = arith.constant 0 : index
      %14 = vector.load %arg4[%c0_11, %c0_12] : memref<128x128xbf16, #tpu.memory_space<vmem>>, vector<128x128xbf16>
      tpu.vector_store %arg4[%c0_11, %c0_12], %13 {strides = array<i32>} : memref<128x128xbf16, #tpu.memory_space<vmem>>, vector<128x128xbf16>,
    } else {
    }
    return
  }
  func.func @transform_0(%arg0: i32, %arg1: i32) -> (i32, i32) {
    %c0_i32 = arith.constant 0 : i32
    return %arg0, %arg1 : i32, i32
  }
  func.func @transform_1(%arg0: i32, %arg1: i32) -> (i32, i32) {
    %c0_i32 = arith.constant 0 : i32
    %c0_i32_0 = arith.constant 0 : i32
    return %arg1, %c0_i32 : i32, i32
  }
  func.func @transform_2(%arg0: i32, %arg1: i32) -> (i32, i32) {
    %c0_i32 = arith.constant 0 : i32
    %c0_i32_0 = arith.constant 0 : i32
    return %arg0, %c0_i32 : i32, i32
  }
}

module attributes {stable_mosaic.version = 11 : i64} {
  func.func @proj_kernel(%arg0: i32, %arg1: memref<128x32xbf16, #tpu.memory_space<vmem>>, %arg2: memref<32x128xbf16, #tpu.memory_space<vmem>>, %arg3: memref<128x128xf32, #tpu.memory_space<vmem>>, %arg4: memref<128x128xbf16, #tpu.memory_space<vmem>>) attributes {dimension_semantics = [#tpu.dimension_semantics<parallel>], iteration_bounds = array<i64: 2>, scalar_prefetch = 0 : i64, scratch_operands = 0 : i64, tpu.core_type = #tpu.core_type<tc>, window_params = [{transform_indices = @transform_0, window_bounds = array<i64: 128, 32>}, {pipeline_mode = #tpu.pipeline_mode<synchronous>, transform_indices = @transform_1, window_bounds = array<i64: 32, 128>}, {transform_indices = @transform_2, window_bounds = array<i64: 128, 128>}, {transform_indices = @transform_3, window_bounds = array<i64: 128, 128>}]} {
    %c0 = arith.constant 0 : index
    %c0_0 = arith.constant 0 : index
    %0 = vector.load %arg1[%c0, %c0_0] : memref<128x32xbf16, #tpu.memory_space<vmem>>, vector<128x32xbf16>
    %c0_1 = arith.constant 0 : index
    %c0_2 = arith.constant 0 : index
    %1 = vector.load %arg2[%c0_1, %c0_2] : memref<32x128xbf16, #tpu.memory_space<vmem>>, vector<32x128xbf16>
    %cst = arith.constant dense<0.000000e+00> : vector<128x128xf32>
    %2 = tpu.matmul %0, %1, %cst {dimension_numbers = #tpu.dot_dimension_numbers<[1], [0], [0], [1], [0, 0, 1, 1], [], []>} : vector<128x32xbf16>, vector<32x128xbf16>, vector<128x128xf32> -> vector<128x128xf32>
    %c0_3 = arith.constant 0 : index
    %c0_4 = arith.constant 0 : index
    %3 = vector.load %arg3[%c0_3, %c0_4] : memref<128x128xf32, #tpu.memory_space<vmem>>, vector<128x128xf32>
    tpu.vector_store %arg3[%c0_3, %c0_4], %2 {strides = array<i32>} : memref<128x128xf32, #tpu.memory_space<vmem>>, vector<128x128xf32>,
    %4 = arith.truncf %2 : vector<128x128xf32> to vector<128x128xbf16>
    %c0_5 = arith.constant 0 : index
    %c0_6 = arith.constant 0 : index
    %5 = vector.load %arg4[%c0_5, %c0_6] : memref<128x128xbf16, #tpu.memory_space<vmem>>, vector<128x128xbf16>
    tpu.vector_store %arg4[%c0_5, %c0_6], %4 {strides = array<i32>} : memref<128x128xbf16, #tpu.memory_space<vmem>>, vector<128x128xbf16>,
    return
  }
  func.func @transform_0(%arg0: i32) -> (i32, i32) {
    %c0_i32 = arith.constant 0 : i32
    %c0_i32_0 = arith.constant 0 : i32
    return %arg0, %c0_i32 : i32, i32
  }
  func.func @transform_1(%arg0: i32) -> (i32, i32) {
    %c0_i32 = arith.constant 0 : i32
    %c0_i32_0 = arith.constant 0 : i32
    %c0_i32_1 = arith.constant 0 : i32
    return %c0_i32, %c0_i32_0 : i32, i32
  }
  func.func @transform_2(%arg0: i32) -> (i32, i32) {
    %c0_i32 = arith.constant 0 : i32
    %c0_i32_0 = arith.constant 0 : i32
    return %arg0, %c0_i32 : i32, i32
  }
  func.func @transform_3(%arg0: i32) -> (i32, i32) {
    %c0_i32 = arith.constant 0 : i32
    %c0_i32_0 = arith.constant 0 : i32
    return %arg0, %c0_i32 : i32, i32
  }
}

module attributes {stable_mosaic.version = 11 : i64} {
  func.func @vertex_agg_kernel(%arg0: i32, %arg1: i32, %arg2: memref<1xf32, #tpu.memory_space<smem>>, %arg3: memref<128x128xbf16, #tpu.memory_space<vmem>>, %arg4: memref<128x128xbf16, #tpu.memory_space<vmem>>, %arg5: memref<128x128xf32, #tpu.memory_space<vmem>>, %arg6: memref<128x128xf32, #tpu.memory_space<vmem>>, %arg7: memref<128x128xf32, #tpu.memory_space<vmem>>) attributes {dimension_semantics = [#tpu.dimension_semantics<parallel>, #tpu.dimension_semantics<arbitrary>], iteration_bounds = array<i64: 2, 2>, scalar_prefetch = 0 : i64, scratch_operands = 1 : i64, tpu.core_type = #tpu.core_type<tc>, window_params = [{transform_indices = @transform_0, window_bounds = array<i64: 1>}, {transform_indices = @transform_1, window_bounds = array<i64: 128, 128>}, {transform_indices = @transform_2, window_bounds = array<i64: 128, 128>}, {transform_indices = @transform_3, window_bounds = array<i64: 128, 128>}, {transform_indices = @transform_4, window_bounds = array<i64: 128, 128>}]} {
    %c0_i32 = arith.constant 0 : i32
    %0 = arith.cmpi eq, %arg1, %c0_i32 : i32
    %1 = arith.extui %0 : i1 to i32
    %c0_i32_0 = arith.constant 0 : i32
    %2 = arith.cmpi ne, %1, %c0_i32_0 : i32
    scf.if %2 {
      %cst_9 = arith.constant 0.000000e+00 : f32
      %12 = vector.broadcast %cst_9 : f32 to vector<128x128xf32>
      %c0_10 = arith.constant 0 : index
      %c0_11 = arith.constant 0 : index
      %13 = vector.load %arg7[%c0_10, %c0_11] : memref<128x128xf32, #tpu.memory_space<vmem>>, vector<128x128xf32>
      tpu.vector_store %arg7[%c0_10, %c0_11], %12 {strides = array<i32>} : memref<128x128xf32, #tpu.memory_space<vmem>>, vector<128x128xf32>,
    } else {
    }
    %c0 = arith.constant 0 : index
    %c0_1 = arith.constant 0 : index
    %3 = vector.load %arg7[%c0, %c0_1] : memref<128x128xf32, #tpu.memory_space<vmem>>, vector<128x128xf32>
    %c0_2 = arith.constant 0 : index
    %c0_3 = arith.constant 0 : index
    %4 = vector.load %arg3[%c0_2, %c0_3] : memref<128x128xbf16, #tpu.memory_space<vmem>>, vector<128x128xbf16>
    %c0_4 = arith.constant 0 : index
    %c0_5 = arith.constant 0 : index
    %5 = vector.load %arg4[%c0_4, %c0_5] : memref<128x128xbf16, #tpu.memory_space<vmem>>, vector<128x128xbf16>
    %cst = arith.constant dense<0.000000e+00> : vector<128x128xf32>
    %6 = tpu.matmul %4, %5, %cst {dimension_numbers = #tpu.dot_dimension_numbers<[1], [0], [0], [1], [0, 0, 1, 1], [], []>} : vector<128x128xbf16>, vector<128x128xbf16>, vector<128x128xf32> -> vector<128x128xf32>
    %7 = arith.addf %3, %6 : vector<128x128xf32>
    %c0_6 = arith.constant 0 : index
    %c0_7 = arith.constant 0 : index
    %8 = vector.load %arg7[%c0_6, %c0_7] : memref<128x128xf32, #tpu.memory_space<vmem>>, vector<128x128xf32>
    tpu.vector_store %arg7[%c0_6, %c0_7], %7 {strides = array<i32>} : memref<128x128xf32, #tpu.memory_space<vmem>>, vector<128x128xf32>,
    %c1_i32 = arith.constant 1 : i32
    %9 = arith.cmpi eq, %arg1, %c1_i32 : i32
    %10 = arith.extui %9 : i1 to i32
    %c0_i32_8 = arith.constant 0 : i32
    %11 = arith.cmpi ne, %10, %c0_i32_8 : i32
    scf.if %11 {
      %c0_9 = arith.constant 0 : index
      %12 = memref.load %arg2[%c0_9] : memref<1xf32, #tpu.memory_space<smem>>
      %cst_10 = arith.constant 1.000000e+00 : f32
      %13 = arith.addf %cst_10, %12 : f32
      %c0_11 = arith.constant 0 : index
      %c0_12 = arith.constant 0 : index
      %14 = vector.load %arg5[%c0_11, %c0_12] : memref<128x128xf32, #tpu.memory_space<vmem>>, vector<128x128xf32>
      %15 = vector.broadcast %13 : f32 to vector<128x128xf32>
      %16 = arith.mulf %15, %14 : vector<128x128xf32>
      %c0_13 = arith.constant 0 : index
      %c0_14 = arith.constant 0 : index
      %17 = vector.load %arg7[%c0_13, %c0_14] : memref<128x128xf32, #tpu.memory_space<vmem>>, vector<128x128xf32>
      %18 = arith.addf %16, %17 : vector<128x128xf32>
      %19 = arith.mulf %18, %18 : vector<128x128xf32>
      %cst_15 = arith.constant dense<0.000000e+00> : vector<128xf32>
      %20 = vector.multi_reduction <add>, %19, %cst_15 [1] : vector<128x128xf32> to vector<128xf32>
      %21 = vector.shape_cast %20 : vector<128xf32> to vector<128x1xf32>
      %cst_16 = arith.constant 0.000000e+00 : f32
      %22 = vector.broadcast %cst_16 : f32 to vector<128x1xf32>
      %23 = arith.cmpf ogt, %21, %22 : vector<128x1xf32>
      %24 = math.rsqrt %21 : vector<128x1xf32>
      %cst_17 = arith.constant 0.000000e+00 : f32
      %25 = vector.broadcast %cst_17 : f32 to vector<128x1xf32>
      %26 = arith.select %23, %24, %25 : vector<128x1xi1>, vector<128x1xf32>
      %27 = vector.broadcast %26 : vector<128x1xf32> to vector<128x128xf32>
      %28 = arith.mulf %18, %27 : vector<128x128xf32>
      %c0_18 = arith.constant 0 : index
      %c0_19 = arith.constant 0 : index
      %29 = vector.load %arg6[%c0_18, %c0_19] : memref<128x128xf32, #tpu.memory_space<vmem>>, vector<128x128xf32>
      tpu.vector_store %arg6[%c0_18, %c0_19], %28 {strides = array<i32>} : memref<128x128xf32, #tpu.memory_space<vmem>>, vector<128x128xf32>,
    } else {
    }
    return
  }
  func.func @transform_0(%arg0: i32, %arg1: i32) -> i32 {
    %c0_i32 = arith.constant 0 : i32
    %c0_i32_0 = arith.constant 0 : i32
    return %c0_i32 : i32
  }
  func.func @transform_1(%arg0: i32, %arg1: i32) -> (i32, i32) {
    %c0_i32 = arith.constant 0 : i32
    return %arg0, %arg1 : i32, i32
  }
  func.func @transform_2(%arg0: i32, %arg1: i32) -> (i32, i32) {
    %c0_i32 = arith.constant 0 : i32
    %c0_i32_0 = arith.constant 0 : i32
    return %arg1, %c0_i32 : i32, i32
  }
  func.func @transform_3(%arg0: i32, %arg1: i32) -> (i32, i32) {
    %c0_i32 = arith.constant 0 : i32
    %c0_i32_0 = arith.constant 0 : i32
    return %arg0, %c0_i32 : i32, i32
  }
  func.func @transform_4(%arg0: i32, %arg1: i32) -> (i32, i32) {
    %c0_i32 = arith.constant 0 : i32
    %c0_i32_0 = arith.constant 0 : i32
    return %arg0, %c0_i32 : i32, i32
  }
}

</mosaic_0001>

<llo_original>
// kernel: unigin_conv.4
$region0: #{unigin_conv.4}
  #allocation0 [shape = 'u32[]', space=smem, size = 0x4, offset = 0x4, fixed_abs, tag = 'smem constant byte address 0x4 - core index']
  #allocation1 [shape = 'u32[72,128]{1,0:T(1,128)}', space=vmem, size = 0x9000, scoped, tag = 'internal scratch']
  #allocation2 [shape = 'f32[128,128]{1,0:T(8,128)}', space=vmem, size = 0x10000, scoped, tag = 'scratch operand']
  %s0 = inlined_call_operand.vmem [shape: bf16[256,256], index: 0, kind: input, shape index: {}]
  %s1 = inlined_call_operand.vmem [shape: bf16[256,128], index: 1, kind: input, shape index: {}]
  %s2 = inlined_call_operand.vmem [shape: bf16[256,128], index: 2, kind: output, shape index: {}]
  %s3 = sld [smem:[#allocation0]]
  $region90: #{unigin_conv.4} parent=0
    _
  %s5 = ssub.s32 1, %s3
  %s6 = scalar_select 0, %s5, %s3
  $region1: #{unigin_conv.4} parent=0
    #allocation3 [shape = 'u8[65536]{0}', space=vmem, size = 0x10000, scoped, tag = 'input window, operand 0']
    loop: start=0, step=1, limit=6
    $region2: #{unigin_conv.4} parent=1 // loop_pre_header
      _
    $region3: #{unigin_conv.4} parent=1 // loop_header
      %s8 = sphi 0, %s12
      %p9 = scmp.ge.s32.totalorder %s8, 6
      %s15 = sphi 0, %s27
      %s16 = sphi 0, %s23
      %s17 = sphi 0, %s15
      %s18 = sphi 0, %s16
      %s19 = sphi 0, %s17
      %s20 = sphi 0, %s18
      %s32 = sphi 0, %s34
      %s35 = sphi 0, %s32
      %s36 = sphi 0, %s35
      %s52 = sphi 0, %s36
      %s58 = sphi 0, %s60
      %s61 = sphi 0, %s58
      %s62 = sphi 0, %s61
      %s78 = sphi 0, %s62
      %s84 = sphi 0, %s86
      %s87 = sphi 0, %s84
      %s88 = sphi 0, %s87
      %s104 = sphi 0, %s88
    $region4: #{unigin_conv.4} parent=1 // loop_header_branch
      %11 = sbr.rel (%p9) target = $region8
    $region5: #{unigin_conv.4} parent=1 // loop_body
      %s13 = ssub.s32 %s8, 1
      %s14 = ssub.s32 %s8, 2
      %s21 = sadd.s32 1, %s16
      %p22 = scmp.ge.s32.totalorder %s21, 2
      %s23 = scalar_select %p22, 0, %s21
      %s24 = sadd.s32 1, %s15
      %s25 = scalar_select %p22, %s24, %s15
      %p26 = scmp.ge.s32.totalorder %s25, 2
      %s27 = scalar_select %p26, 0, %s25
      %s28 = ssub.s32 %s15, %s27
      %s29 = ssub.s32 %s16, %s23
      %s30 = sor.u32 %s28, %s29
      %p31 = scmp.eq.s32.totalorder %s30, 0
      %s33 = sadd.s32 %s32, 1
      %s34 = scalar_select %p31, %s32, %s33
      %p37 = pneg %p31
      %p38 = scmp.eq.s32.totalorder %s8, 3
      %p39 = por %p37, %p38
      %p40 = scmp.ne.s32.totalorder %s32, %s35
      %p41 = scmp.eq.s32.totalorder %s8, 0
      %p42 = por %p40, %p41
      %p43 = scmp.ne.s32.totalorder %s32, %s35
      %p44 = scmp.eq.s32.totalorder %s13, 3
      %p45 = por %p43, %p44
      %p46 = scmp.ne.s32.totalorder %s35, %s36
      %p47 = scmp.eq.s32.totalorder %s13, 0
      %p48 = por %p46, %p47
      %p49 = scmp.ne.s32.totalorder %s35, %s36
      %p50 = scmp.eq.s32.totalorder %s14, 3
      %p51 = por %p49, %p50
      %p53 = scmp.ne.s32.totalorder %s36, %s52
      %p54 = scmp.eq.s32.totalorder %s14, 0
      %p55 = por %p53, %p54
      %s56 = ssub.s32 %s16, %s23
      %p57 = scmp.eq.s32.totalorder %s56, 0
      %s59 = sadd.s32 %s58, 1
      %s60 = scalar_select %p57, %s58, %s59
      %p63 = pneg %p57
      %p64 = scmp.eq.s32.totalorder %s8, 3
      %p65 = por %p63, %p64
      %p66 = scmp.ne.s32.totalorder %s58, %s61
      %p67 = scmp.eq.s32.totalorder %s8, 0
      %p68 = por %p66, %p67
      %p69 = scmp.ne.s32.totalorder %s58, %s61
      %p70 = scmp.eq.s32.totalorder %s13, 3
      %p71 = por %p69, %p70
      %p72 = scmp.ne.s32.totalorder %s61, %s62
      %p73 = scmp.eq.s32.totalorder %s13, 0
      %p74 = por %p72, %p73
      %p75 = scmp.ne.s32.totalorder %s61, %s62
      %p76 = scmp.eq.s32.totalorder %s14, 3
      %p77 = por %p75, %p76
      %p79 = scmp.ne.s32.totalorder %s62, %s78
      %p80 = scmp.eq.s32.totalorder %s14, 0
      %p81 = por %p79, %p80
      %s82 = ssub.s32 %s15, %s27
      %p83 = scmp.eq.s32.totalorder %s82, 0
      %s85 = sadd.s32 %s84, 1
      %s86 = scalar_select %p83, %s84, %s85
      %p89 = pneg %p83
      %p90 = scmp.eq.s32.totalorder %s8, 3
      %p91 = por %p89, %p90
      %p92 = scmp.ne.s32.totalorder %s84, %s87
      %p93 = scmp.eq.s32.totalorder %s8, 0
      %p94 = por %p92, %p93
      %p95 = scmp.ne.s32.totalorder %s84, %s87
      %p96 = scmp.eq.s32.totalorder %s13, 3
      %p97 = por %p95, %p96
      %p98 = scmp.ne.s32.totalorder %s87, %s88
      %p99 = scmp.eq.s32.totalorder %s13, 0
      %p100 = por %p98, %p99
      %p101 = scmp.ne.s32.totalorder %s87, %s88
      %p102 = scmp.eq.s32.totalorder %s14, 3
      %p103 = por %p101, %p102
      %p105 = scmp.ne.s32.totalorder %s88, %s104
      %p106 = scmp.eq.s32.totalorder %s14, 0
      %p107 = por %p105, %p106
      %p108 = scmp.le.s32.totalorder 1, %s8
      %p109 = scmp.lt.s32.totalorder %s8, 5
      %p110 = pnand %p108, %p109
      %p111 = pneg %p110
      // Predicated region
      $region9: #{unigin_conv.4} parent=5 // pred_check
        _
      $region10: #{unigin_conv.4} parent=5 // pred_check_branch
        %113 = sbr.rel (%p110) target = $region12
      $region11: #{unigin_conv.4} parent=5 // pred_region
        %s114 = ssub.s32 %s8, 1
      $region12: #{unigin_conv.4} parent=5 // pred_fallthru
        _
      %p115 = scmp.lt.s32.totalorder %s8, 4
      // Predicated region
      $region13: #{unigin_conv.4} parent=5 // pred_check
        %p116 = pneg %p115
      $region14: #{unigin_conv.4} parent=5 // pred_check_branch
        %118 = sbr.rel (%p116) target = $region16
      $region15: #{unigin_conv.4} parent=5 // pred_region
        // Predicated region
        $region17: #{unigin_conv.4} parent=15 // pred_check
          %p119 = pneg %p42
        $region18: #{unigin_conv.4} parent=15 // pred_check_branch
          %121 = sbr.rel (%p119) target = $region20
        $region19: #{unigin_conv.4} parent=15 // pred_region
          %s122 = sand.u32 %s32, 1
          %s123 = sand.u32 %s32, 1
          %s124 = smul.addr %s123, 64
          %s125 = scalar_lea.vmem [#allocation3], %s124
          %s126 = smul.u32 16, %s15
          %s127 = smul.addr %s126, 2
          %s128 = sadd.s32 %s16, %s127
          %s129 = smul.addr %s128, 4
          %s130 = scalar_lea.vmem %s0, %s129
          // Predicated region
          $region21: #{unigin_conv.4} parent=19 // pred_check
            _
          $region22: #{unigin_conv.4} parent=19 // pred_check_branch
            %132 = sbr.rel (0) target = $region24
          $region23: #{unigin_conv.4} parent=19 // pred_region
            // Predicated region
            $region25: #{unigin_conv.4} parent=23 // pred_check
              _
            $region26: #{unigin_conv.4} parent=23 // pred_check_branch
              %134 = sbr.rel target = $region28
            $region27: #{unigin_conv.4} parent=23 // pred_region
              // Predicated region
              $region40: #{unigin_conv.4} parent=27 // pred_check
                _
              $region41: #{unigin_conv.4} parent=27 // pred_check_branch
                %180 = sbr.rel (0) target = $region43
              $region42: #{unigin_conv.4} parent=27 // pred_region
                loop: start=0, step=1, limit=1
                $region44: #{unigin_conv.4} parent=42 // loop_pre_header
                  _
                $region45: #{unigin_conv.4} parent=42 // loop_header
                  %s182 = sphi 0, %s186
                  %p183 = scmp.ge.s32.totalorder %s182, 1
                  %s187 = sphi %s130, %s130
                  %s188 = sphi %s125, %s125
                $region46: #{unigin_conv.4} parent=42 // loop_header_branch
                  %185 = sbr.rel (%p183) target = $region50
                $region47: #{unigin_conv.4} parent=42 // loop_body
                  _
                $region48: #{unigin_conv.4} parent=42 // loop_footer
                  %s186 = sadd.s32 1, %s182
                $region49: #{unigin_conv.4} parent=42 // loop_footer_branch
                  %181 = sbr.rel target = $region45
                $region50: #{unigin_conv.4} parent=42 // loop_exit
                  _
                %s190 = ssub.s32 16, 1
                loop: start=0, step=1, limit=1
                $region51: #{unigin_conv.4} parent=42 // loop_pre_header
                  _
                $region52: #{unigin_conv.4} parent=42 // loop_header
                  %s192 = sphi 0, %s196
                  %p193 = scmp.ge.s32.totalorder %s192, 1
                  %s197 = sphi %s130, %s130
                  %s198 = sphi %s125, %s125
                $region53: #{unigin_conv.4} parent=42 // loop_header_branch
                  %195 = sbr.rel (%p193) target = $region57
                $region54: #{unigin_conv.4} parent=42 // loop_body
                  %v199 = vld [vmem:[%s197] sm:%s190]
                  %200 = vst [vmem:[%s198] sm:%s190] %v199
                  %v201 = vld [vmem:[%s197 + $0x8] sm:%s190]
                  %202 = vst [vmem:[%s198 + $0x4] sm:%s190] %v201
                  %v203 = vld [vmem:[%s197 + $0x10] sm:%s190]
                  %204 = vst [vmem:[%s198 + $0x8] sm:%s190] %v203
                  %v205 = vld [vmem:[%s197 + $0x18] sm:%s190]
                  %206 = vst [vmem:[%s198 + $0xc] sm:%s190] %v205
                  %v207 = vld [vmem:[%s197 + $0x20] sm:%s190]
                  %208 = vst [vmem:[%s198 + $0x10] sm:%s190] %v207
                  %v209 = vld [vmem:[%s197 + $0x28] sm:%s190]
                  %210 = vst [vmem:[%s198 + $0x14] sm:%s190] %v209
                  %v211 = vld [vmem:[%s197 + $0x30] sm:%s190]
                  %212 = vst [vmem:[%s198 + $0x18] sm:%s190] %v211
                  %v213 = vld [vmem:[%s197 + $0x38] sm:%s190]
                  %214 = vst [vmem:[%s198 + $0x1c] sm:%s190] %v213
                  %v215 = vld [vmem:[%s197 + $0x40] sm:%s190]
                  %216 = vst [vmem:[%s198 + $0x20] sm:%s190] %v215
                  %v217 = vld [vmem:[%s197 + $0x48] sm:%s190]
                  %218 = vst [vmem:[%s198 + $0x24] sm:%s190] %v217
                  %v219 = vld [vmem:[%s197 + $0x50] sm:%s190]
                  %220 = vst [vmem:[%s198 + $0x28] sm:%s190] %v219
                  %v221 = vld [vmem:[%s197 + $0x58] sm:%s190]
                  %222 = vst [vmem:[%s198 + $0x2c] sm:%s190] %v221
                  %v223 = vld [vmem:[%s197 + $0x60] sm:%s190]
                  %224 = vst [vmem:[%s198 + $0x30] sm:%s190] %v223
                  %v225 = vld [vmem:[%s197 + $0x68] sm:%s190]
                  %226 = vst [vmem:[%s198 + $0x34] sm:%s190] %v225
                  %v227 = vld [vmem:[%s197 + $0x70] sm:%s190]
                  %228 = vst [vmem:[%s198 + $0x38] sm:%s190] %v227
                  %v229 = vld [vmem:[%s197 + $0x78] sm:%s190]
                  %230 = vst [vmem:[%s198 + $0x3c] sm:%s190] %v229
                $region55: #{unigin_conv.4} parent=42 // loop_footer
                  %s196 = sadd.s32 1, %s192
                $region56: #{unigin_conv.4} parent=42 // loop_footer_branch
                  %191 = sbr.rel target = $region52
                $region57: #{unigin_conv.4} parent=42 // loop_exit
                  _
              $region43: #{unigin_conv.4} parent=27 // pred_fallthru
                _
            $region28: #{unigin_conv.4} parent=23 // pred_fallthru
              _
            // Predicated region
            $region29: #{unigin_conv.4} parent=23 // pred_check
              _
            $region30: #{unigin_conv.4} parent=23 // pred_check_branch
              %136 = sbr.rel (0) target = $region32
            $region31: #{unigin_conv.4} parent=23 // pred_region
              %s138 = ssub.s32 16, 1
              loop: start=0, step=1, limit=1
              $region33: #{unigin_conv.4} parent=31 // loop_pre_header
                _
              $region34: #{unigin_conv.4} parent=31 // loop_header
                %s140 = sphi 0, %s144
                %p141 = scmp.ge.s32.totalorder %s140, 1
                %s145 = sphi %s130, %s130
                %s146 = sphi %s125, %s125
              $region35: #{unigin_conv.4} parent=31 // loop_header_branch
                %143 = sbr.rel (%p141) target = $region39
              $region36: #{unigin_conv.4} parent=31 // loop_body
                %v147 = vld [vmem:[%s145] sm:%s138]
                %148 = vst [vmem:[%s146] sm:%s138] %v147
                %v149 = vld [vmem:[%s145 + $0x8] sm:%s138]
                %150 = vst [vmem:[%s146 + $0x4] sm:%s138] %v149
                %v151 = vld [vmem:[%s145 + $0x10] sm:%s138]
                %152 = vst [vmem:[%s146 + $0x8] sm:%s138] %v151
                %v153 = vld [vmem:[%s145 + $0x18] sm:%s138]
                %154 = vst [vmem:[%s146 + $0xc] sm:%s138] %v153
                %v155 = vld [vmem:[%s145 + $0x20] sm:%s138]
                %156 = vst [vmem:[%s146 + $0x10] sm:%s138] %v155
                %v157 = vld [vmem:[%s145 + $0x28] sm:%s138]
                %158 = vst [vmem:[%s146 + $0x14] sm:%s138] %v157
                %v159 = vld [vmem:[%s145 + $0x30] sm:%s138]
                %160 = vst [vmem:[%s146 + $0x18] sm:%s138] %v159
                %v161 = vld [vmem:[%s145 + $0x38] sm:%s138]
                %162 = vst [vmem:[%s146 + $0x1c] sm:%s138] %v161
                %v163 = vld [vmem:[%s145 + $0x40] sm:%s138]
                %164 = vst [vmem:[%s146 + $0x20] sm:%s138] %v163
                %v165 = vld [vmem:[%s145 + $0x48] sm:%s138]
                %166 = vst [vmem:[%s146 + $0x24] sm:%s138] %v165
                %v167 = vld [vmem:[%s145 + $0x50] sm:%s138]
                %168 = vst [vmem:[%s146 + $0x28] sm:%s138] %v167
                %v169 = vld [vmem:[%s145 + $0x58] sm:%s138]
                %170 = vst [vmem:[%s146 + $0x2c] sm:%s138] %v169
                %v171 = vld [vmem:[%s145 + $0x60] sm:%s138]
                %172 = vst [vmem:[%s146 + $0x30] sm:%s138] %v171
                %v173 = vld [vmem:[%s145 + $0x68] sm:%s138]
                %174 = vst [vmem:[%s146 + $0x34] sm:%s138] %v173
                %v175 = vld [vmem:[%s145 + $0x70] sm:%s138]
                %176 = vst [vmem:[%s146 + $0x38] sm:%s138] %v175
                %v177 = vld [vmem:[%s145 + $0x78] sm:%s138]
                %178 = vst [vmem:[%s146 + $0x3c] sm:%s138] %v177
              $region37: #{unigin_conv.4} parent=31 // loop_footer
                %s144 = sadd.s32 1, %s140
              $region38: #{unigin_conv.4} parent=31 // loop_footer_branch
                %139 = sbr.rel target = $region34
              $region39: #{unigin_conv.4} parent=31 // loop_exit
                _
            $region32: #{unigin_conv.4} parent=23 // pred_fallthru
              _
          $region24: #{unigin_conv.4} parent=19 // pred_fallthru
            _
          %231 = vnop
        $region20: #{unigin_conv.4} parent=15 // pred_fallthru
          _
        // Predicated region
        $region58: #{unigin_conv.4} parent=15 // pred_check
          %p232 = pneg %p68
        $region59: #{unigin_conv.4} parent=15 // pred_check_branch
          %234 = sbr.rel (%p232) target = $region61
        $region60: #{unigin_conv.4} parent=15 // pred_region
          %s235 = smul.u32 16, %s16
          %p236 = scmp.lt.s32.totalorder %s235, 31
          %s237 = scalar_select %p236, %s235, 31
          %s238 = smul.addr %s237, 4
          %s239 = scalar_lea.vmem %s1, %s238
          %s240 = smul.u32 16, %s16
        $region61: #{unigin_conv.4} parent=15 // pred_fallthru
          _
      $region16: #{unigin_conv.4} parent=5 // pred_fallthru
        _
      %p241 = scmp.le.s32.totalorder 1, %s8
      %p242 = scmp.lt.s32.totalorder %s8, 5
      %p243 = pnand %p241, %p242
      %p244 = pneg %p243
      // Predicated region
      $region62: #{unigin_conv.4} parent=5 // pred_check
        _
      $region63: #{unigin_conv.4} parent=5 // pred_check_branch
        %246 = sbr.rel (%p243) target = $region65
      $region64: #{unigin_conv.4} parent=5 // pred_region
        %s247 = ssub.s32 %s8, 1
        %s248 = sand.u32 %s35, 1
        %s249 = sand.u32 %s35, 1
        %s250 = smul.addr %s249, 64
        %s251 = scalar_lea.vmem [#allocation3], %s250
        // Predicated region
        $region66: #{unigin_conv.4} parent=64 // pred_check
          %p252 = pneg %p48
        $region67: #{unigin_conv.4} parent=64 // pred_check_branch
          %254 = sbr.rel (%p252) target = $region69
        $region68: #{unigin_conv.4} parent=64 // pred_region
          _
        $region69: #{unigin_conv.4} parent=64 // pred_fallthru
          _
        %s255 = sand.u32 %s35, 1
        %s256 = sand.u32 %s35, 1
        %s257 = smul.addr %s256, 64
        %s258 = scalar_lea.vmem [#allocation3], %s257
        %p259 = pneg %p48
        %p260 = pneg %p45
        %s261 = smul.u32 16, %s18
        %p262 = scmp.lt.s32.totalorder %s261, 31
        %s263 = scalar_select %p262, %s261, 31
        %s264 = smul.addr %s263, 4
        %s265 = scalar_lea.vmem %s1, %s264
        %p266 = pneg %p74
        %p267 = pneg %p71
        %p268 = pneg %p100
        %p269 = pneg %p97
        %s270 = smul.u32 16, %s17
        %p271 = scmp.lt.s32.totalorder %s270, 31
        %s272 = scalar_select %p271, %s270, 31
        %s273 = smul.addr %s272, 4
        %s274 = scalar_lea.vmem %s2, %s273
        %s275 = smul.u32 16, %s17
        %s276 = smul.u32 16, %s18
        %p277 = scmp.lt.s32.totalorder %s276, 31
        %s278 = scalar_select %p277, %s276, 31
        %s279 = smul.addr %s278, 4
        %s280 = scalar_lea.vmem %s1, %s279
        %s281 = smul.u32 16, %s18
        %s282 = smul.u32 16, %s17
        %p283 = scmp.lt.s32.totalorder %s282, 31
        %s284 = scalar_select %p283, %s282, 31
        %s285 = smul.addr %s284, 4
        %s286 = scalar_lea.vmem %s2, %s285
        %s287 = smul.u32 16, %s17
        %p288 = scmp.eq.s32.totalorder %s18, 0
        // Predicated region
        $region70: #{unigin_conv.4} parent=64 // pred_check
          %p289 = pneg %p288
        $region71: #{unigin_conv.4} parent=64 // pred_check_branch
          %291 = sbr.rel (%p289) target = $region73
        $region72: #{unigin_conv.4} parent=64 // pred_region
          %292 = vst [vmem:[#allocation2] sm:$0xff] 0.0
          %293 = vst [vmem:[#allocation2 + $0x8] sm:$0xff] 0.0
          %294 = vst [vmem:[#allocation2 + $0x10] sm:$0xff] 0.0
          %295 = vst [vmem:[#allocation2 + $0x18] sm:$0xff] 0.0
          %296 = vst [vmem:[#allocation2 + $0x20] sm:$0xff] 0.0
          %297 = vst [vmem:[#allocation2 + $0x28] sm:$0xff] 0.0
          %298 = vst [vmem:[#allocation2 + $0x30] sm:$0xff] 0.0
          %299 = vst [vmem:[#allocation2 + $0x38] sm:$0xff] 0.0
          %300 = vst [vmem:[#allocation2 + $0x40] sm:$0xff] 0.0
          %301 = vst [vmem:[#allocation2 + $0x48] sm:$0xff] 0.0
          %302 = vst [vmem:[#allocation2 + $0x50] sm:$0xff] 0.0
          %303 = vst [vmem:[#allocation2 + $0x58] sm:$0xff] 0.0
          %304 = vst [vmem:[#allocation2 + $0x60] sm:$0xff] 0.0
          %305 = vst [vmem:[#allocation2 + $0x68] sm:$0xff] 0.0
          %306 = vst [vmem:[#allocation2 + $0x70] sm:$0xff] 0.0
          %307 = vst [vmem:[#allocation2 + $0x78] sm:$0xff] 0.0
        $region73: #{unigin_conv.4} parent=64 // pred_fallthru
          _
        %v308 = vld [vmem:[#allocation2] sm:$0xff]
        %v309 = vld [vmem:[#allocation2 + $0x8] sm:$0xff]
        %v310 = vld [vmem:[#allocation2 + $0x10] sm:$0xff]
        %v311 = vld [vmem:[#allocation2 + $0x18] sm:$0xff]
        %v312 = vld [vmem:[#allocation2 + $0x20] sm:$0xff]
        %v313 = vld [vmem:[#allocation2 + $0x28] sm:$0xff]
        %v314 = vld [vmem:[#allocation2 + $0x30] sm:$0xff]
        %v315 = vld [vmem:[#allocation2 + $0x38] sm:$0xff]
        %v316 = vld [vmem:[#allocation2 + $0x40] sm:$0xff]
        %v317 = vld [vmem:[#allocation2 + $0x48] sm:$0xff]
        %v318 = vld [vmem:[#allocation2 + $0x50] sm:$0xff]
        %v319 = vld [vmem:[#allocation2 + $0x58] sm:$0xff]
        %v320 = vld [vmem:[#allocation2 + $0x60] sm:$0xff]
        %v321 = vld [vmem:[#allocation2 + $0x68] sm:$0xff]
        %v322 = vld [vmem:[#allocation2 + $0x70] sm:$0xff]
        %v323 = vld [vmem:[#allocation2 + $0x78] sm:$0xff]
        %v324 = vld [vmem:[%s251] sm:$0xf]
        %v325 = vld [vmem:[%s251 + $0x4] sm:$0xf]
        %v326 = vld [vmem:[%s251 + $0x8] sm:$0xf]
        %v327 = vld [vmem:[%s251 + $0xc] sm:$0xf]
        %v328 = vld [vmem:[%s251 + $0x10] sm:$0xf]
        %v329 = vld [vmem:[%s251 + $0x14] sm:$0xf]
        %v330 = vld [vmem:[%s251 + $0x18] sm:$0xf]
        %v331 = vld [vmem:[%s251 + $0x1c] sm:$0xf]
        %v332 = vld [vmem:[%s251 + $0x20] sm:$0xf]
        %v333 = vld [vmem:[%s251 + $0x24] sm:$0xf]
        %v334 = vld [vmem:[%s251 + $0x28] sm:$0xf]
        %v335 = vld [vmem:[%s251 + $0x2c] sm:$0xf]
        %v336 = vld [vmem:[%s251 + $0x30] sm:$0xf]
        %v337 = vld [vmem:[%s251 + $0x34] sm:$0xf]
        %v338 = vld [vmem:[%s251 + $0x38] sm:$0xf]
        %v339 = vld [vmem:[%s251 + $0x3c] sm:$0xf]
        %v340 = vld [vmem:[%s280] sm:$0xf]
        %v341 = vld [vmem:[%s280 + $0x4] sm:$0xf]
        %v342 = vld [vmem:[%s280 + $0x8] sm:$0xf]
        %v343 = vld [vmem:[%s280 + $0xc] sm:$0xf]
        %v344 = vld [vmem:[%s280 + $0x10] sm:$0xf]
        %v345 = vld [vmem:[%s280 + $0x14] sm:$0xf]
        %v346 = vld [vmem:[%s280 + $0x18] sm:$0xf]
        %v347 = vld [vmem:[%s280 + $0x1c] sm:$0xf]
        %v348 = vld [vmem:[%s280 + $0x20] sm:$0xf]
        %v349 = vld [vmem:[%s280 + $0x24] sm:$0xf]
        %v350 = vld [vmem:[%s280 + $0x28] sm:$0xf]
        %v351 = vld [vmem:[%s280 + $0x2c] sm:$0xf]
        %v352 = vld [vmem:[%s280 + $0x30] sm:$0xf]
        %v353 = vld [vmem:[%s280 + $0x34] sm:$0xf]
        %v354 = vld [vmem:[%s280 + $0x38] sm:$0xf]
        %v355 = vld [vmem:[%s280 + $0x3c] sm:$0xf]
        %v372 = vunpack.c.l.b16 %v324
        %v373 = vunpack.c.l.b16 %v325
        %v374 = vunpack.c.l.b16 %v326
        %v375 = vunpack.c.l.b16 %v327
        %v376 = vunpack.c.l.b16 %v328
        %v377 = vunpack.c.l.b16 %v329
        %v378 = vunpack.c.l.b16 %v330
        %v379 = vunpack.c.l.b16 %v331
        %v380 = vunpack.c.l.b16 %v332
        %v381 = vunpack.c.l.b16 %v333
        %v382 = vunpack.c.l.b16 %v334
        %v383 = vunpack.c.l.b16 %v335
        %v384 = vunpack.c.l.b16 %v336
        %v385 = vunpack.c.l.b16 %v337
        %v386 = vunpack.c.l.b16 %v338
        %v387 = vunpack.c.l.b16 %v339
        %v388 = vpack.c.b16 %v373, %v372
        %v389 = vpack.c.b16 %v375, %v374
        %v390 = vpack.c.b16 %v377, %v376
        %v391 = vpack.c.b16 %v379, %v378
        %v392 = vpack.c.b16 %v381, %v380
        %v393 = vpack.c.b16 %v383, %v382
        %v394 = vpack.c.b16 %v385, %v384
        %v395 = vpack.c.b16 %v387, %v386
        %v420 = vunpack.c.l.b16 %v340
        %v421 = vunpack.c.l.b16 %v341
        %v422 = vunpack.c.l.b16 %v342
        %v423 = vunpack.c.l.b16 %v343
        %v424 = vunpack.c.l.b16 %v344
        %v425 = vunpack.c.l.b16 %v345
        %v426 = vunpack.c.l.b16 %v346
        %v427 = vunpack.c.l.b16 %v347
        %v428 = vunpack.c.l.b16 %v348
        %v429 = vunpack.c.l.b16 %v349
        %v430 = vunpack.c.l.b16 %v350
        %v431 = vunpack.c.l.b16 %v351
        %v432 = vunpack.c.l.b16 %v352
        %v433 = vunpack.c.l.b16 %v353
        %v434 = vunpack.c.l.b16 %v354
        %v435 = vunpack.c.l.b16 %v355
        %v436 = vpack.c.b16 %v421, %v420
        %v437 = vpack.c.b16 %v423, %v422
        %v438 = vpack.c.b16 %v425, %v424
        %v439 = vpack.c.b16 %v427, %v426
        %v440 = vpack.c.b16 %v429, %v428
        %v441 = vpack.c.b16 %v431, %v430
        %v442 = vpack.c.b16 %v433, %v432
        %v443 = vpack.c.b16 %v435, %v434
        %452 = vmatpush.bf16.msra.mxu0 %v443
        %453 = vmatpush.bf16.msra.mxu0 %v442
        %454 = vmatpush.bf16.msra.mxu0 %v441
        %455 = vmatpush.bf16.msra.mxu0 %v440
        %456 = vmatpush.bf16.msra.mxu0 %v439
        %457 = vmatpush.bf16.msra.mxu0 %v438
        %458 = vmatpush.bf16.msra.mxu0 %v437
        %459 = vmatpush.bf16.msra.mxu0 %v436
        %460 = vmatmul.bf16.gmra.mxu0 %v388
        %v461 = vpop.f32.mrf.mxu0
        %v462 = vadd.f32 0.0, %v461
        %v463 = vpop.f32.mrf.mxu0
        %v464 = vadd.f32 0.0, %v463
        %465 = vmatmul.bf16.gmra.mxu0 %v389
        %v466 = vpop.f32.mrf.mxu0
        %v467 = vadd.f32 0.0, %v466
        %v468 = vpop.f32.mrf.mxu0
        %v469 = vadd.f32 0.0, %v468
        %470 = vmatmul.bf16.gmra.mxu0 %v390
        %v471 = vpop.f32.mrf.mxu0
        %v472 = vadd.f32 0.0, %v471
        %v473 = vpop.f32.mrf.mxu0
        %v474 = vadd.f32 0.0, %v473
        %475 = vmatmul.bf16.gmra.mxu0 %v391
        %v476 = vpop.f32.mrf.mxu0
        %v477 = vadd.f32 0.0, %v476
        %v478 = vpop.f32.mrf.mxu0
        %v479 = vadd.f32 0.0, %v478
        %480 = vmatmul.bf16.gmra.mxu0 %v392
        %v481 = vpop.f32.mrf.mxu0
        %v482 = vadd.f32 0.0, %v481
        %v483 = vpop.f32.mrf.mxu0
        %v484 = vadd.f32 0.0, %v483
        %485 = vmatmul.bf16.gmra.mxu0 %v393
        %v486 = vpop.f32.mrf.mxu0
        %v487 = vadd.f32 0.0, %v486
        %v488 = vpop.f32.mrf.mxu0
        %v489 = vadd.f32 0.0, %v488
        %490 = vmatmul.bf16.gmra.mxu0 %v394
        %v491 = vpop.f32.mrf.mxu0
        %v492 = vadd.f32 0.0, %v491
        %v493 = vpop.f32.mrf.mxu0
        %v494 = vadd.f32 0.0, %v493
        %495 = vmatmul.bf16.gmra.mxu0 %v395
        %v496 = vpop.f32.mrf.mxu0
        %v497 = vadd.f32 0.0, %v496
        %v498 = vpop.f32.mrf.mxu0
        %v499 = vadd.f32 0.0, %v498
        %500 = vdwg.mxu0
        %v501 = vadd.f32 %v308, %v462
        %v502 = vadd.f32 %v309, %v464
        %v503 = vadd.f32 %v310, %v467
        %v504 = vadd.f32 %v311, %v469
        %v505 = vadd.f32 %v312, %v472
        %v506 = vadd.f32 %v313, %v474
        %v507 = vadd.f32 %v314, %v477
        %v508 = vadd.f32 %v315, %v479
        %v509 = vadd.f32 %v316, %v482
        %v510 = vadd.f32 %v317, %v484
        %v511 = vadd.f32 %v318, %v487
        %v512 = vadd.f32 %v319, %v489
        %v513 = vadd.f32 %v320, %v492
        %v514 = vadd.f32 %v321, %v494
        %v515 = vadd.f32 %v322, %v497
        %v516 = vadd.f32 %v323, %v499
        %517 = vst [vmem:[#allocation2] sm:$0xff] %v501
        %518 = vst [vmem:[#allocation2 + $0x8] sm:$0xff] %v502
        %519 = vst [vmem:[#allocation2 + $0x10] sm:$0xff] %v503
        %520 = vst [vmem:[#allocation2 + $0x18] sm:$0xff] %v504
        %521 = vst [vmem:[#allocation2 + $0x20] sm:$0xff] %v505
        %522 = vst [vmem:[#allocation2 + $0x28] sm:$0xff] %v506
        %523 = vst [vmem:[#allocation2 + $0x30] sm:$0xff] %v507
        %524 = vst [vmem:[#allocation2 + $0x38] sm:$0xff] %v508
        %525 = vst [vmem:[#allocation2 + $0x40] sm:$0xff] %v509
        %526 = vst [vmem:[#allocation2 + $0x48] sm:$0xff] %v510
        %527 = vst [vmem:[#allocation2 + $0x50] sm:$0xff] %v511
        %528 = vst [vmem:[#allocation2 + $0x58] sm:$0xff] %v512
        %529 = vst [vmem:[#allocation2 + $0x60] sm:$0xff] %v513
        %530 = vst [vmem:[#allocation2 + $0x68] sm:$0xff] %v514
        %531 = vst [vmem:[#allocation2 + $0x70] sm:$0xff] %v515
        %532 = vst [vmem:[#allocation2 + $0x78] sm:$0xff] %v516
        %p533 = scmp.eq.s32.totalorder %s18, 1
        // Predicated region
        $region74: #{unigin_conv.4} parent=64 // pred_check
          %p534 = pneg %p533
        $region75: #{unigin_conv.4} parent=64 // pred_check_branch
          %536 = sbr.rel (%p534) target = $region77
        $region76: #{unigin_conv.4} parent=64 // pred_region
          %v537 = vld [vmem:[#allocation2] sm:$0xff]
          %v538 = vld [vmem:[#allocation2 + $0x8] sm:$0xff]
          %v539 = vld [vmem:[#allocation2 + $0x10] sm:$0xff]
          %v540 = vld [vmem:[#allocation2 + $0x18] sm:$0xff]
          %v541 = vld [vmem:[#allocation2 + $0x20] sm:$0xff]
          %v542 = vld [vmem:[#allocation2 + $0x28] sm:$0xff]
          %v543 = vld [vmem:[#allocation2 + $0x30] sm:$0xff]
          %v544 = vld [vmem:[#allocation2 + $0x38] sm:$0xff]
          %v545 = vld [vmem:[#allocation2 + $0x40] sm:$0xff]
          %v546 = vld [vmem:[#allocation2 + $0x48] sm:$0xff]
          %v547 = vld [vmem:[#allocation2 + $0x50] sm:$0xff]
          %v548 = vld [vmem:[#allocation2 + $0x58] sm:$0xff]
          %v549 = vld [vmem:[#allocation2 + $0x60] sm:$0xff]
          %v550 = vld [vmem:[#allocation2 + $0x68] sm:$0xff]
          %v551 = vld [vmem:[#allocation2 + $0x70] sm:$0xff]
          %v552 = vld [vmem:[#allocation2 + $0x78] sm:$0xff]
          %v553 = vpack.c.bf16 %v537, %v537
          %v554 = vpack.c.bf16 %v538, %v538
          %v555 = vpack.c.bf16 %v539, %v539
          %v556 = vpack.c.bf16 %v540, %v540
          %v557 = vpack.c.bf16 %v541, %v541
          %v558 = vpack.c.bf16 %v542, %v542
          %v559 = vpack.c.bf16 %v543, %v543
          %v560 = vpack.c.bf16 %v544, %v544
          %v561 = vpack.c.bf16 %v545, %v545
          %v562 = vpack.c.bf16 %v546, %v546
          %v563 = vpack.c.bf16 %v547, %v547
          %v564 = vpack.c.bf16 %v548, %v548
          %v565 = vpack.c.bf16 %v549, %v549
          %v566 = vpack.c.bf16 %v550, %v550
          %v567 = vpack.c.bf16 %v551, %v551
          %v568 = vpack.c.bf16 %v552, %v552
          %569 = vst [vmem:[%s286] sm:$0xf] %v553
          %570 = vst [vmem:[%s286 + $0x4] sm:$0xf] %v554
          %571 = vst [vmem:[%s286 + $0x8] sm:$0xf] %v555
          %572 = vst [vmem:[%s286 + $0xc] sm:$0xf] %v556
          %573 = vst [vmem:[%s286 + $0x10] sm:$0xf] %v557
          %574 = vst [vmem:[%s286 + $0x14] sm:$0xf] %v558
          %575 = vst [vmem:[%s286 + $0x18] sm:$0xf] %v559
          %576 = vst [vmem:[%s286 + $0x1c] sm:$0xf] %v560
          %577 = vst [vmem:[%s286 + $0x20] sm:$0xf] %v561
          %578 = vst [vmem:[%s286 + $0x24] sm:$0xf] %v562
          %579 = vst [vmem:[%s286 + $0x28] sm:$0xf] %v563
          %580 = vst [vmem:[%s286 + $0x2c] sm:$0xf] %v564
          %581 = vst [vmem:[%s286 + $0x30] sm:$0xf] %v565
          %582 = vst [vmem:[%s286 + $0x34] sm:$0xf] %v566
          %583 = vst [vmem:[%s286 + $0x38] sm:$0xf] %v567
          %584 = vst [vmem:[%s286 + $0x3c] sm:$0xf] %v568
        $region77: #{unigin_conv.4} parent=64 // pred_fallthru
          _
        %s585 = smul.u32 16, %s17
        %p586 = scmp.lt.s32.totalorder %s585, 31
        %s587 = scalar_select %p586, %s585, 31
        %s588 = smul.addr %s587, 4
        %s589 = scalar_lea.vmem %s2, %s588
        // Predicated region
        $region78: #{unigin_conv.4} parent=64 // pred_check
          %p590 = pneg %p97
        $region79: #{unigin_conv.4} parent=64 // pred_check_branch
          %592 = sbr.rel (%p590) target = $region81
        $region80: #{unigin_conv.4} parent=64 // pred_region
          %s593 = smul.u32 16, %s17
        $region81: #{unigin_conv.4} parent=64 // pred_fallthru
          _
      $region65: #{unigin_conv.4} parent=5 // pred_fallthru
        _
      %p594 = scmp.le.s32.totalorder 2, %s8
      // Predicated region
      $region82: #{unigin_conv.4} parent=5 // pred_check
        %p595 = pneg %p594
      $region83: #{unigin_conv.4} parent=5 // pred_check_branch
        %597 = sbr.rel (%p595) target = $region85
      $region84: #{unigin_conv.4} parent=5 // pred_region
        %s598 = ssub.s32 %s8, 2
        // Predicated region
        $region86: #{unigin_conv.4} parent=84 // pred_check
          %p599 = pneg %p103
        $region87: #{unigin_conv.4} parent=84 // pred_check_branch
          %601 = sbr.rel (%p599) target = $region89
        $region88: #{unigin_conv.4} parent=84 // pred_region
          %s602 = smul.u32 16, %s19
          %p603 = scmp.lt.s32.totalorder %s602, 31
          %s604 = scalar_select %p603, %s602, 31
          %s605 = smul.addr %s604, 4
          %s606 = scalar_lea.vmem %s2, %s605
        $region89: #{unigin_conv.4} parent=84 // pred_fallthru
          _
      $region85: #{unigin_conv.4} parent=5 // pred_fallthru
        _
    $region6: #{unigin_conv.4} parent=1 // loop_footer
      %s12 = sadd.s32 1, %s8
    $region7: #{unigin_conv.4} parent=1 // loop_footer_branch
      %7 = sbr.rel target = $region3
    $region8: #{unigin_conv.4} parent=1 // loop_exit
      _

// kernel: unigin_conv.3
$region0: #{unigin_conv.3}
  #allocation0 [shape = 'u32[]', space=smem, size = 0x4, offset = 0x4, fixed_abs, tag = 'smem constant byte address 0x4 - core index']
  #allocation1 [shape = 'u32[72,128]{1,0:T(1,128)}', space=vmem, size = 0x9000, scoped, tag = 'internal scratch']
  %s0 = inlined_call_operand.vmem [shape: bf16[256,32], index: 0, kind: input, shape index: {}]
  %s1 = inlined_call_operand.vmem [shape: bf16[32,128], index: 1, kind: input, shape index: {}]
  %s2 = inlined_call_operand.vmem [shape: f32[256,128], index: 2, kind: output, shape index: {0}]
  %s3 = inlined_call_operand.vmem [shape: bf16[256,128], index: 3, kind: output, shape index: {1}]
  %4 = xla_tuple %s2, %s3
  %s5 = sld [smem:[#allocation0]]
  $region49: #{unigin_conv.3} parent=0
    _
  %s7 = ssub.s32 1, %s5
  %s8 = scalar_select 0, %s7, %s5
  loop: start=0, step=1, limit=4
  $region2: #{unigin_conv.3} parent=0 // loop_pre_header
    _
  $region3: #{unigin_conv.3} parent=0 // loop_header
    %s10 = sphi 0, %s14
    %p11 = scmp.ge.s32.totalorder %s10, 4
    %s20 = sphi 0, %s22
    %s23 = sphi 0, %s20
    %s24 = sphi 0, %s23
    %s40 = sphi 0, %s24
    %s44 = sphi 0, %s44
    %s46 = sphi 0, %s44
    %s47 = sphi 0, %s46
    %s61 = sphi 0, %s47
    %s67 = sphi 0, %s69
    %s70 = sphi 0, %s67
    %s71 = sphi 0, %s70
    %s87 = sphi 0, %s71
    %s93 = sphi 0, %s95
    %s96 = sphi 0, %s93
    %s97 = sphi 0, %s96
    %s113 = sphi 0, %s97
  $region4: #{unigin_conv.3} parent=0 // loop_header_branch
    %13 = sbr.rel (%p11) target = $region8
  $region5: #{unigin_conv.3} parent=0 // loop_body
    %s15 = ssub.s32 %s10, 1
    %s16 = ssub.s32 %s10, 2
    %s17 = sadd.s32 %s10, 1
    %s18 = ssub.s32 %s10, %s17
    %p19 = scmp.eq.s32.totalorder %s18, 0
    %s21 = sadd.s32 %s20, 1
    %s22 = scalar_select %p19, %s20, %s21
    %p25 = pneg %p19
    %p26 = scmp.eq.s32.totalorder %s10, 1
    %p27 = por %p25, %p26
    %p28 = scmp.ne.s32.totalorder %s20, %s23
    %p29 = scmp.eq.s32.totalorder %s10, 0
    %p30 = por %p28, %p29
    %p31 = scmp.ne.s32.totalorder %s20, %s23
    %p32 = scmp.eq.s32.totalorder %s15, 1
    %p33 = por %p31, %p32
    %p34 = scmp.ne.s32.totalorder %s23, %s24
    %p35 = scmp.eq.s32.totalorder %s15, 0
    %p36 = por %p34, %p35
    %p37 = scmp.ne.s32.totalorder %s23, %s24
    %p38 = scmp.eq.s32.totalorder %s16, 1
    %p39 = por %p37, %p38
    %p41 = scmp.ne.s32.totalorder %s24, %s40
    %p42 = scmp.eq.s32.totalorder %s16, 0
    %p43 = por %p41, %p42
    %s45 = sadd.s32 %s44, 1
    %p48 = scmp.eq.s32.totalorder %s10, 1
    %p49 = scmp.ne.s32.totalorder %s44, %s46
    %p50 = scmp.eq.s32.totalorder %s10, 0
    %p51 = por %p49, %p50
    %p52 = scmp.ne.s32.totalorder %s44, %s46
    %p53 = scmp.eq.s32.totalorder %s15, 1
    %p54 = por %p52, %p53
    %p55 = scmp.ne.s32.totalorder %s46, %s47
    %p56 = scmp.eq.s32.totalorder %s15, 0
    %p57 = por %p55, %p56
    %p58 = scmp.ne.s32.totalorder %s46, %s47
    %p59 = scmp.eq.s32.totalorder %s16, 1
    %p60 = por %p58, %p59
    %p62 = scmp.ne.s32.totalorder %s47, %s61
    %p63 = scmp.eq.s32.totalorder %s16, 0
    %p64 = por %p62, %p63
    %s65 = ssub.s32 %s10, %s17
    %p66 = scmp.eq.s32.totalorder %s65, 0
    %s68 = sadd.s32 %s67, 1
    %s69 = scalar_select %p66, %s67, %s68
    %p72 = pneg %p66
    %p73 = scmp.eq.s32.totalorder %s10, 1
    %p74 = por %p72, %p73
    %p75 = scmp.ne.s32.totalorder %s67, %s70
    %p76 = scmp.eq.s32.totalorder %s10, 0
    %p77 = por %p75, %p76
    %p78 = scmp.ne.s32.totalorder %s67, %s70
    %p79 = scmp.eq.s32.totalorder %s15, 1
    %p80 = por %p78, %p79
    %p81 = scmp.ne.s32.totalorder %s70, %s71
    %p82 = scmp.eq.s32.totalorder %s15, 0
    %p83 = por %p81, %p82
    %p84 = scmp.ne.s32.totalorder %s70, %s71
    %p85 = scmp.eq.s32.totalorder %s16, 1
    %p86 = por %p84, %p85
    %p88 = scmp.ne.s32.totalorder %s71, %s87
    %p89 = scmp.eq.s32.totalorder %s16, 0
    %p90 = por %p88, %p89
    %s91 = ssub.s32 %s10, %s17
    %p92 = scmp.eq.s32.totalorder %s91, 0
    %s94 = sadd.s32 %s93, 1
    %s95 = scalar_select %p92, %s93, %s94
    %p98 = pneg %p92
    %p99 = scmp.eq.s32.totalorder %s10, 1
    %p100 = por %p98, %p99
    %p101 = scmp.ne.s32.totalorder %s93, %s96
    %p102 = scmp.eq.s32.totalorder %s10, 0
    %p103 = por %p101, %p102
    %p104 = scmp.ne.s32.totalorder %s93, %s96
    %p105 = scmp.eq.s32.totalorder %s15, 1
    %p106 = por %p104, %p105
    %p107 = scmp.ne.s32.totalorder %s96, %s97
    %p108 = scmp.eq.s32.totalorder %s15, 0
    %p109 = por %p107, %p108
    %p110 = scmp.ne.s32.totalorder %s96, %s97
    %p111 = scmp.eq.s32.totalorder %s16, 1
    %p112 = por %p110, %p111
    %p114 = scmp.ne.s32.totalorder %s97, %s113
    %p115 = scmp.eq.s32.totalorder %s16, 0
    %p116 = por %p114, %p115
    %p117 = scmp.le.s32.totalorder 1, %s10
    %p118 = scmp.lt.s32.totalorder %s10, 3
    %p119 = pnand %p117, %p118
    %p120 = pneg %p119
    // Predicated region
    $region9: #{unigin_conv.3} parent=5 // pred_check
      _
    $region10: #{unigin_conv.3} parent=5 // pred_check_branch
      %122 = sbr.rel (%p119) target = $region12
    $region11: #{unigin_conv.3} parent=5 // pred_region
      %s123 = ssub.s32 %s10, 1
      // Predicated region
      $region13: #{unigin_conv.3} parent=11 // pred_check
        %p124 = pneg %p57
      $region14: #{unigin_conv.3} parent=11 // pred_check_branch
        %126 = sbr.rel (%p124) target = $region16
      $region15: #{unigin_conv.3} parent=11 // pred_region
        _
      $region16: #{unigin_conv.3} parent=11 // pred_fallthru
        _
    $region12: #{unigin_conv.3} parent=5 // pred_fallthru
      _
    %p127 = scmp.lt.s32.totalorder %s10, 2
    // Predicated region
    $region17: #{unigin_conv.3} parent=5 // pred_check
      %p128 = pneg %p127
    $region18: #{unigin_conv.3} parent=5 // pred_check_branch
      %130 = sbr.rel (%p128) target = $region20
    $region19: #{unigin_conv.3} parent=5 // pred_region
      // Predicated region
      $region21: #{unigin_conv.3} parent=19 // pred_check
        %p131 = pneg %p30
      $region22: #{unigin_conv.3} parent=19 // pred_check_branch
        %133 = sbr.rel (%p131) target = $region24
      $region23: #{unigin_conv.3} parent=19 // pred_region
        %s134 = smul.u32 16, %s10
        %p135 = scmp.lt.s32.totalorder %s134, 31
        %s136 = scalar_select %p135, %s134, 31
        %s137 = smul.addr %s136, 4
        %s138 = scalar_lea.vmem %s0, %s137
        %s139 = smul.u32 16, %s10
      $region24: #{unigin_conv.3} parent=19 // pred_fallthru
        _
    $region20: #{unigin_conv.3} parent=5 // pred_fallthru
      _
    %p140 = scmp.le.s32.totalorder 1, %s10
    %p141 = scmp.lt.s32.totalorder %s10, 3
    %p142 = pnand %p140, %p141
    %p143 = pneg %p142
    // Predicated region
    $region25: #{unigin_conv.3} parent=5 // pred_check
      _
    $region26: #{unigin_conv.3} parent=5 // pred_check_branch
      %145 = sbr.rel (%p142) target = $region28
    $region27: #{unigin_conv.3} parent=5 // pred_region
      %s146 = ssub.s32 %s10, 1
      %s147 = smul.u32 16, %s15
      %p148 = scmp.lt.s32.totalorder %s147, 31
      %s149 = scalar_select %p148, %s147, 31
      %s150 = smul.addr %s149, 4
      %s151 = scalar_lea.vmem %s0, %s150
      %p152 = pneg %p36
      %p153 = pneg %p33
      %p154 = pneg %p57
      %p155 = pneg %p54
      %p156 = pneg %p83
      %p157 = pneg %p80
      %s158 = smul.u32 16, %s15
      %p159 = scmp.lt.s32.totalorder %s158, 31
      %s160 = scalar_select %p159, %s158, 31
      %s161 = smul.addr %s160, 8
      %s162 = scalar_lea.vmem %s2, %s161
      %p163 = pneg %p109
      %p164 = pneg %p106
      %s165 = smul.u32 16, %s15
      %p166 = scmp.lt.s32.totalorder %s165, 31
      %s167 = scalar_select %p166, %s165, 31
      %s168 = smul.addr %s167, 4
      %s169 = scalar_lea.vmem %s3, %s168
      %s170 = smul.u32 16, %s15
      %p171 = scmp.lt.s32.totalorder %s170, 31
      %s172 = scalar_select %p171, %s170, 31
      %s173 = smul.addr %s172, 4
      %s174 = scalar_lea.vmem %s0, %s173
      %s175 = smul.u32 16, %s15
      %s176 = smul.u32 16, %s15
      %p177 = scmp.lt.s32.totalorder %s176, 31
      %s178 = scalar_select %p177, %s176, 31
      %s179 = smul.addr %s178, 8
      %s180 = scalar_lea.vmem %s2, %s179
      %s181 = smul.u32 16, %s15
      %s182 = smul.u32 16, %s15
      %p183 = scmp.lt.s32.totalorder %s182, 31
      %s184 = scalar_select %p183, %s182, 31
      %s185 = smul.addr %s184, 4
      %s186 = scalar_lea.vmem %s3, %s185
      %s187 = smul.u32 16, %s15
      %v189 = vld [vmem:[%s174] sm:$0xf]
      %v190 = vld [vmem:[%s174 + $0x4] sm:$0xf]
      %v191 = vld [vmem:[%s174 + $0x8] sm:$0xf]
      %v192 = vld [vmem:[%s174 + $0xc] sm:$0xf]
      %v193 = vld [vmem:[%s174 + $0x10] sm:$0xf]
      %v194 = vld [vmem:[%s174 + $0x14] sm:$0xf]
      %v195 = vld [vmem:[%s174 + $0x18] sm:$0xf]
      %v196 = vld [vmem:[%s174 + $0x1c] sm:$0xf]
      %v197 = vld [vmem:[%s174 + $0x20] sm:$0xf]
      %v198 = vld [vmem:[%s174 + $0x24] sm:$0xf]
      %v199 = vld [vmem:[%s174 + $0x28] sm:$0xf]
      %v200 = vld [vmem:[%s174 + $0x2c] sm:$0xf]
      %v201 = vld [vmem:[%s174 + $0x30] sm:$0xf]
      %v202 = vld [vmem:[%s174 + $0x34] sm:$0xf]
      %v203 = vld [vmem:[%s174 + $0x38] sm:$0xf]
      %v204 = vld [vmem:[%s174 + $0x3c] sm:$0xf]
      %v205 = vld [vmem:[%s1] sm:$0xf]
      %v206 = vld [vmem:[%s1 + $0x4] sm:$0xf]
      %v207 = vld [vmem:[%s1 + $0x8] sm:$0xf]
      %v208 = vld [vmem:[%s1 + $0xc] sm:$0xf]
      %v225 = vunpack.c.l.b16 %v189
      %v226 = vunpack.c.l.b16 %v190
      %v227 = vunpack.c.l.b16 %v191
      %v228 = vunpack.c.l.b16 %v192
      %v229 = vunpack.c.l.b16 %v193
      %v230 = vunpack.c.l.b16 %v194
      %v231 = vunpack.c.l.b16 %v195
      %v232 = vunpack.c.l.b16 %v196
      %v233 = vunpack.c.l.b16 %v197
      %v234 = vunpack.c.l.b16 %v198
      %v235 = vunpack.c.l.b16 %v199
      %v236 = vunpack.c.l.b16 %v200
      %v237 = vunpack.c.l.b16 %v201
      %v238 = vunpack.c.l.b16 %v202
      %v239 = vunpack.c.l.b16 %v203
      %v240 = vunpack.c.l.b16 %v204
      %v241 = vpack.c.b16 %v226, %v225
      %v242 = vpack.c.b16 %v228, %v227
      %v243 = vpack.c.b16 %v230, %v229
      %v244 = vpack.c.b16 %v232, %v231
      %v245 = vpack.c.b16 %v234, %v233
      %v246 = vpack.c.b16 %v236, %v235
      %v247 = vpack.c.b16 %v238, %v237
      %v248 = vpack.c.b16 %v240, %v239
      %v253 = vunpack.c.l.b16 %v205
      %v254 = vunpack.c.l.b16 %v206
      %v255 = vunpack.c.l.b16 %v207
      %v256 = vunpack.c.l.b16 %v208
      %v257 = vpack.c.b16 %v254, %v253
      %v258 = vpack.c.b16 %v256, %v255
      %vm261 = vcmask 261120
      %v263 = vsel %vm261, %v241, 0
      %v266 = vsel %vm261, %v242, 0
      %v269 = vsel %vm261, %v243, 0
      %v272 = vsel %vm261, %v244, 0
      %v275 = vsel %vm261, %v245, 0
      %v278 = vsel %vm261, %v246, 0
      %v281 = vsel %vm261, %v247, 0
      %v284 = vsel %vm261, %v248, 0
      %286 = vmatpush.bf16.msra.mxu0 0
      %287 = vmatpush.bf16.msra.mxu0 0
      %288 = vmatpush.bf16.msra.mxu0 0
      %289 = vmatpush.bf16.msra.mxu0 0
      %290 = vmatpush.bf16.msra.mxu0 0
      %291 = vmatpush.bf16.msra.mxu0 0
      %292 = vmatpush.bf16.msra.mxu0 %v258
      %293 = vmatpush.bf16.msra.mxu0 %v257
      %294 = vmatmul.bf16.gmra.mxu0 %v263
      %v295 = vpop.f32.mrf.mxu0
      %v296 = vadd.f32 0.0, %v295
      %v297 = vpop.f32.mrf.mxu0
      %v298 = vadd.f32 0.0, %v297
      %299 = vmatmul.bf16.gmra.mxu0 %v266
      %v300 = vpop.f32.mrf.mxu0
      %v301 = vadd.f32 0.0, %v300
      %v302 = vpop.f32.mrf.mxu0
      %v303 = vadd.f32 0.0, %v302
      %304 = vmatmul.bf16.gmra.mxu0 %v269
      %v305 = vpop.f32.mrf.mxu0
      %v306 = vadd.f32 0.0, %v305
      %v307 = vpop.f32.mrf.mxu0
      %v308 = vadd.f32 0.0, %v307
      %309 = vmatmul.bf16.gmra.mxu0 %v272
      %v310 = vpop.f32.mrf.mxu0
      %v311 = vadd.f32 0.0, %v310
      %v312 = vpop.f32.mrf.mxu0
      %v313 = vadd.f32 0.0, %v312
      %314 = vmatmul.bf16.gmra.mxu0 %v275
      %v315 = vpop.f32.mrf.mxu0
      %v316 = vadd.f32 0.0, %v315
      %v317 = vpop.f32.mrf.mxu0
      %v318 = vadd.f32 0.0, %v317
      %319 = vmatmul.bf16.gmra.mxu0 %v278
      %v320 = vpop.f32.mrf.mxu0
      %v321 = vadd.f32 0.0, %v320
      %v322 = vpop.f32.mrf.mxu0
      %v323 = vadd.f32 0.0, %v322
      %324 = vmatmul.bf16.gmra.mxu0 %v281
      %v325 = vpop.f32.mrf.mxu0
      %v326 = vadd.f32 0.0, %v325
      %v327 = vpop.f32.mrf.mxu0
      %v328 = vadd.f32 0.0, %v327
      %329 = vmatmul.bf16.gmra.mxu0 %v284
      %v330 = vpop.f32.mrf.mxu0
      %v331 = vadd.f32 0.0, %v330
      %v332 = vpop.f32.mrf.mxu0
      %v333 = vadd.f32 0.0, %v332
      %334 = vdwg.mxu0
      %335 = vst [vmem:[%s180] sm:$0xff] %v296
      %336 = vst [vmem:[%s180 + $0x8] sm:$0xff] %v298
      %337 = vst [vmem:[%s180 + $0x10] sm:$0xff] %v301
      %338 = vst [vmem:[%s180 + $0x18] sm:$0xff] %v303
      %339 = vst [vmem:[%s180 + $0x20] sm:$0xff] %v306
      %340 = vst [vmem:[%s180 + $0x28] sm:$0xff] %v308
      %341 = vst [vmem:[%s180 + $0x30] sm:$0xff] %v311
      %342 = vst [vmem:[%s180 + $0x38] sm:$0xff] %v313
      %343 = vst [vmem:[%s180 + $0x40] sm:$0xff] %v316
      %344 = vst [vmem:[%s180 + $0x48] sm:$0xff] %v318
      %345 = vst [vmem:[%s180 + $0x50] sm:$0xff] %v321
      %346 = vst [vmem:[%s180 + $0x58] sm:$0xff] %v323
      %347 = vst [vmem:[%s180 + $0x60] sm:$0xff] %v326
      %348 = vst [vmem:[%s180 + $0x68] sm:$0xff] %v328
      %349 = vst [vmem:[%s180 + $0x70] sm:$0xff] %v331
      %350 = vst [vmem:[%s180 + $0x78] sm:$0xff] %v333
      %v351 = vpack.c.bf16 %v296, %v296
      %v352 = vpack.c.bf16 %v298, %v298
      %v353 = vpack.c.bf16 %v301, %v301
      %v354 = vpack.c.bf16 %v303, %v303
      %v355 = vpack.c.bf16 %v306, %v306
      %v356 = vpack.c.bf16 %v308, %v308
      %v357 = vpack.c.bf16 %v311, %v311
      %v358 = vpack.c.bf16 %v313, %v313
      %v359 = vpack.c.bf16 %v316, %v316
      %v360 = vpack.c.bf16 %v318, %v318
      %v361 = vpack.c.bf16 %v321, %v321
      %v362 = vpack.c.bf16 %v323, %v323
      %v363 = vpack.c.bf16 %v326, %v326
      %v364 = vpack.c.bf16 %v328, %v328
      %v365 = vpack.c.bf16 %v331, %v331
      %v366 = vpack.c.bf16 %v333, %v333
      %367 = vst [vmem:[%s186] sm:$0xf] %v351
      %368 = vst [vmem:[%s186 + $0x4] sm:$0xf] %v352
      %369 = vst [vmem:[%s186 + $0x8] sm:$0xf] %v353
      %370 = vst [vmem:[%s186 + $0xc] sm:$0xf] %v354
      %371 = vst [vmem:[%s186 + $0x10] sm:$0xf] %v355
      %372 = vst [vmem:[%s186 + $0x14] sm:$0xf] %v356
      %373 = vst [vmem:[%s186 + $0x18] sm:$0xf] %v357
      %374 = vst [vmem:[%s186 + $0x1c] sm:$0xf] %v358
      %375 = vst [vmem:[%s186 + $0x20] sm:$0xf] %v359
      %376 = vst [vmem:[%s186 + $0x24] sm:$0xf] %v360
      %377 = vst [vmem:[%s186 + $0x28] sm:$0xf] %v361
      %378 = vst [vmem:[%s186 + $0x2c] sm:$0xf] %v362
      %379 = vst [vmem:[%s186 + $0x30] sm:$0xf] %v363
      %380 = vst [vmem:[%s186 + $0x34] sm:$0xf] %v364
      %381 = vst [vmem:[%s186 + $0x38] sm:$0xf] %v365
      %382 = vst [vmem:[%s186 + $0x3c] sm:$0xf] %v366
      %s383 = smul.u32 16, %s15
      %p384 = scmp.lt.s32.totalorder %s383, 31
      %s385 = scalar_select %p384, %s383, 31
      %s386 = smul.addr %s385, 8
      %s387 = scalar_lea.vmem %s2, %s386
      %s388 = smul.u32 16, %s15
      %p389 = scmp.lt.s32.totalorder %s388, 31
      %s390 = scalar_select %p389, %s388, 31
      %s391 = smul.addr %s390, 4
      %s392 = scalar_lea.vmem %s3, %s391
      // Predicated region
      $region29: #{unigin_conv.3} parent=27 // pred_check
        %p393 = pneg %p80
      $region30: #{unigin_conv.3} parent=27 // pred_check_branch
        %395 = sbr.rel (%p393) target = $region32
      $region31: #{unigin_conv.3} parent=27 // pred_region
        %s396 = smul.u32 16, %s15
      $region32: #{unigin_conv.3} parent=27 // pred_fallthru
        _
      // Predicated region
      $region33: #{unigin_conv.3} parent=27 // pred_check
        %p397 = pneg %p106
      $region34: #{unigin_conv.3} parent=27 // pred_check_branch
        %399 = sbr.rel (%p397) target = $region36
      $region35: #{unigin_conv.3} parent=27 // pred_region
        %s400 = smul.u32 16, %s15
      $region36: #{unigin_conv.3} parent=27 // pred_fallthru
        _
    $region28: #{unigin_conv.3} parent=5 // pred_fallthru
      _
    %p401 = scmp.le.s32.totalorder 2, %s10
    // Predicated region
    $region37: #{unigin_conv.3} parent=5 // pred_check
      %p402 = pneg %p401
    $region38: #{unigin_conv.3} parent=5 // pred_check_branch
      %404 = sbr.rel (%p402) target = $region40
    $region39: #{unigin_conv.3} parent=5 // pred_region
      %s405 = ssub.s32 %s10, 2
      // Predicated region
      $region41: #{unigin_conv.3} parent=39 // pred_check
        %p406 = pneg %p86
      $region42: #{unigin_conv.3} parent=39 // pred_check_branch
        %408 = sbr.rel (%p406) target = $region44
      $region43: #{unigin_conv.3} parent=39 // pred_region
        %s409 = smul.u32 16, %s16
        %p410 = scmp.lt.s32.totalorder %s409, 31
        %s411 = scalar_select %p410, %s409, 31
        %s412 = smul.addr %s411, 8
        %s413 = scalar_lea.vmem %s2, %s412
      $region44: #{unigin_conv.3} parent=39 // pred_fallthru
        _
      // Predicated region
      $region45: #{unigin_conv.3} parent=39 // pred_check
        %p414 = pneg %p112
      $region46: #{unigin_conv.3} parent=39 // pred_check_branch
        %416 = sbr.rel (%p414) target = $region48
      $region47: #{unigin_conv.3} parent=39 // pred_region
        %s417 = smul.u32 16, %s16
        %p418 = scmp.lt.s32.totalorder %s417, 31
        %s419 = scalar_select %p418, %s417, 31
        %s420 = smul.addr %s419, 4
        %s421 = scalar_lea.vmem %s3, %s420
      $region48: #{unigin_conv.3} parent=39 // pred_fallthru
        _
    $region40: #{unigin_conv.3} parent=5 // pred_fallthru
      _
  $region6: #{unigin_conv.3} parent=0 // loop_footer
    %s14 = sadd.s32 1, %s10
  $region7: #{unigin_conv.3} parent=0 // loop_footer_branch
    %9 = sbr.rel target = $region3
  $region8: #{unigin_conv.3} parent=0 // loop_exit
    _

// kernel: unigin_conv.5
$region0: #{unigin_conv.5}
  #allocation0 [shape = 'u32[]', space=smem, size = 0x4, offset = 0x4, fixed_abs, tag = 'smem constant byte address 0x4 - core index']
  #allocation1 [shape = 'u32[72,128]{1,0:T(1,128)}', space=vmem, size = 0x9000, scoped, tag = 'internal scratch']
  #allocation2 [shape = 'f32[128,128]{1,0:T(8,128)}', space=vmem, size = 0x10000, scoped, tag = 'scratch operand']
  #allocation3 [shape = 'f32[1]{0:T(128)S(6)}', space=smem, size = 0x200, scoped, tag = 'scoped memory for unigin_conv.5']
  %s0 = inlined_call_operand.<no memory space> [shape: f32[1], index: 0, kind: input, shape index: {}]
  %s1 = inlined_call_operand.vmem [shape: bf16[256,256], index: 1, kind: input, shape index: {}]
  %s2 = inlined_call_operand.vmem [shape: bf16[256,128], index: 2, kind: input, shape index: {}]
  %s3 = inlined_call_operand.vmem [shape: f32[256,128], index: 3, kind: input, shape index: {}]
  %s4 = inlined_call_operand.vmem [shape: f32[256,128], index: 4, kind: output, shape index: {}]
  %s5 = sld [smem:[#allocation0]]
  $region98: #{unigin_conv.5} parent=0
    _
  %s7 = ssub.s32 1, %s5
  %s8 = scalar_select 0, %s7, %s5
  %9 = sst [smem:[#allocation3]] %s0
  $region1: #{unigin_conv.5} parent=0
    #allocation4 [shape = 'u8[65536]{0}', space=vmem, size = 0x10000, scoped, tag = 'input window, operand 1']
    loop: start=0, step=1, limit=6
    $region2: #{unigin_conv.5} parent=1 // loop_pre_header
      _
    $region3: #{unigin_conv.5} parent=1 // loop_header
      %s11 = sphi 0, %s15
      %p12 = scmp.ge.s32.totalorder %s11, 6
      %s18 = sphi 0, %s30
      %s19 = sphi 0, %s26
      %s20 = sphi 0, %s18
      %s21 = sphi 0, %s19
      %s22 = sphi 0, %s20
      %s23 = sphi 0, %s21
      %s31 = sphi 0, %s31
      %s33 = sphi 0, %s31
      %s34 = sphi 0, %s33
      %s48 = sphi 0, %s34
      %s56 = sphi 0, %s58
      %s59 = sphi 0, %s56
      %s60 = sphi 0, %s59
      %s76 = sphi 0, %s60
      %s82 = sphi 0, %s84
      %s85 = sphi 0, %s82
      %s86 = sphi 0, %s85
      %s102 = sphi 0, %s86
      %s108 = sphi 0, %s110
      %s111 = sphi 0, %s108
      %s112 = sphi 0, %s111
      %s128 = sphi 0, %s112
      %s134 = sphi 0, %s136
      %s137 = sphi 0, %s134
      %s138 = sphi 0, %s137
      %s154 = sphi 0, %s138
    $region4: #{unigin_conv.5} parent=1 // loop_header_branch
      %14 = sbr.rel (%p12) target = $region8
    $region5: #{unigin_conv.5} parent=1 // loop_body
      %s16 = ssub.s32 %s11, 1
      %s17 = ssub.s32 %s11, 2
      %s24 = sadd.s32 1, %s19
      %p25 = scmp.ge.s32.totalorder %s24, 2
      %s26 = scalar_select %p25, 0, %s24
      %s27 = sadd.s32 1, %s18
      %s28 = scalar_select %p25, %s27, %s18
      %p29 = scmp.ge.s32.totalorder %s28, 2
      %s30 = scalar_select %p29, 0, %s28
      %s32 = sadd.s32 %s31, 1
      %p35 = scmp.eq.s32.totalorder %s11, 3
      %p36 = scmp.ne.s32.totalorder %s31, %s33
      %p37 = scmp.eq.s32.totalorder %s11, 0
      %p38 = por %p36, %p37
      %p39 = scmp.ne.s32.totalorder %s31, %s33
      %p40 = scmp.eq.s32.totalorder %s16, 3
      %p41 = por %p39, %p40
      %p42 = scmp.ne.s32.totalorder %s33, %s34
      %p43 = scmp.eq.s32.totalorder %s16, 0
      %p44 = por %p42, %p43
      %p45 = scmp.ne.s32.totalorder %s33, %s34
      %p46 = scmp.eq.s32.totalorder %s17, 3
      %p47 = por %p45, %p46
      %p49 = scmp.ne.s32.totalorder %s34, %s48
      %p50 = scmp.eq.s32.totalorder %s17, 0
      %p51 = por %p49, %p50
      %s52 = ssub.s32 %s18, %s30
      %s53 = ssub.s32 %s19, %s26
      %s54 = sor.u32 %s52, %s53
      %p55 = scmp.eq.s32.totalorder %s54, 0
      %s57 = sadd.s32 %s56, 1
      %s58 = scalar_select %p55, %s56, %s57
      %p61 = pneg %p55
      %p62 = scmp.eq.s32.totalorder %s11, 3
      %p63 = por %p61, %p62
      %p64 = scmp.ne.s32.totalorder %s56, %s59
      %p65 = scmp.eq.s32.totalorder %s11, 0
      %p66 = por %p64, %p65
      %p67 = scmp.ne.s32.totalorder %s56, %s59
      %p68 = scmp.eq.s32.totalorder %s16, 3
      %p69 = por %p67, %p68
      %p70 = scmp.ne.s32.totalorder %s59, %s60
      %p71 = scmp.eq.s32.totalorder %s16, 0
      %p72 = por %p70, %p71
      %p73 = scmp.ne.s32.totalorder %s59, %s60
      %p74 = scmp.eq.s32.totalorder %s17, 3
      %p75 = por %p73, %p74
      %p77 = scmp.ne.s32.totalorder %s60, %s76
      %p78 = scmp.eq.s32.totalorder %s17, 0
      %p79 = por %p77, %p78
      %s80 = ssub.s32 %s19, %s26
      %p81 = scmp.eq.s32.totalorder %s80, 0
      %s83 = sadd.s32 %s82, 1
      %s84 = scalar_select %p81, %s82, %s83
      %p87 = pneg %p81
      %p88 = scmp.eq.s32.totalorder %s11, 3
      %p89 = por %p87, %p88
      %p90 = scmp.ne.s32.totalorder %s82, %s85
      %p91 = scmp.eq.s32.totalorder %s11, 0
      %p92 = por %p90, %p91
      %p93 = scmp.ne.s32.totalorder %s82, %s85
      %p94 = scmp.eq.s32.totalorder %s16, 3
      %p95 = por %p93, %p94
      %p96 = scmp.ne.s32.totalorder %s85, %s86
      %p97 = scmp.eq.s32.totalorder %s16, 0
      %p98 = por %p96, %p97
      %p99 = scmp.ne.s32.totalorder %s85, %s86
      %p100 = scmp.eq.s32.totalorder %s17, 3
      %p101 = por %p99, %p100
      %p103 = scmp.ne.s32.totalorder %s86, %s102
      %p104 = scmp.eq.s32.totalorder %s17, 0
      %p105 = por %p103, %p104
      %s106 = ssub.s32 %s18, %s30
      %p107 = scmp.eq.s32.totalorder %s106, 0
      %s109 = sadd.s32 %s108, 1
      %s110 = scalar_select %p107, %s108, %s109
      %p113 = pneg %p107
      %p114 = scmp.eq.s32.totalorder %s11, 3
      %p115 = por %p113, %p114
      %p116 = scmp.ne.s32.totalorder %s108, %s111
      %p117 = scmp.eq.s32.totalorder %s11, 0
      %p118 = por %p116, %p117
      %p119 = scmp.ne.s32.totalorder %s108, %s111
      %p120 = scmp.eq.s32.totalorder %s16, 3
      %p121 = por %p119, %p120
      %p122 = scmp.ne.s32.totalorder %s111, %s112
      %p123 = scmp.eq.s32.totalorder %s16, 0
      %p124 = por %p122, %p123
      %p125 = scmp.ne.s32.totalorder %s111, %s112
      %p126 = scmp.eq.s32.totalorder %s17, 3
      %p127 = por %p125, %p126
      %p129 = scmp.ne.s32.totalorder %s112, %s128
      %p130 = scmp.eq.s32.totalorder %s17, 0
      %p131 = por %p129, %p130
      %s132 = ssub.s32 %s18, %s30
      %p133 = scmp.eq.s32.totalorder %s132, 0
      %s135 = sadd.s32 %s134, 1
      %s136 = scalar_select %p133, %s134, %s135
      %p139 = pneg %p133
      %p140 = scmp.eq.s32.totalorder %s11, 3
      %p141 = por %p139, %p140
      %p142 = scmp.ne.s32.totalorder %s134, %s137
      %p143 = scmp.eq.s32.totalorder %s11, 0
      %p144 = por %p142, %p143
      %p145 = scmp.ne.s32.totalorder %s134, %s137
      %p146 = scmp.eq.s32.totalorder %s16, 3
      %p147 = por %p145, %p146
      %p148 = scmp.ne.s32.totalorder %s137, %s138
      %p149 = scmp.eq.s32.totalorder %s16, 0
      %p150 = por %p148, %p149
      %p151 = scmp.ne.s32.totalorder %s137, %s138
      %p152 = scmp.eq.s32.totalorder %s17, 3
      %p153 = por %p151, %p152
      %p155 = scmp.ne.s32.totalorder %s138, %s154
      %p156 = scmp.eq.s32.totalorder %s17, 0
      %p157 = por %p155, %p156
      %p158 = scmp.le.s32.totalorder 1, %s11
      %p159 = scmp.lt.s32.totalorder %s11, 5
      %p160 = pnand %p158, %p159
      %p161 = pneg %p160
      // Predicated region
      $region9: #{unigin_conv.5} parent=5 // pred_check
        _
      $region10: #{unigin_conv.5} parent=5 // pred_check_branch
        %163 = sbr.rel (%p160) target = $region12
      $region11: #{unigin_conv.5} parent=5 // pred_region
        %s164 = ssub.s32 %s11, 1
        // Predicated region
        $region13: #{unigin_conv.5} parent=11 // pred_check
          %p165 = pneg %p44
        $region14: #{unigin_conv.5} parent=11 // pred_check_branch
          %167 = sbr.rel (%p165) target = $region16
        $region15: #{unigin_conv.5} parent=11 // pred_region
          _
        $region16: #{unigin_conv.5} parent=11 // pred_fallthru
          _
      $region12: #{unigin_conv.5} parent=5 // pred_fallthru
        _
      %p168 = scmp.lt.s32.totalorder %s11, 4
      // Predicated region
      $region17: #{unigin_conv.5} parent=5 // pred_check
        %p169 = pneg %p168
      $region18: #{unigin_conv.5} parent=5 // pred_check_branch
        %171 = sbr.rel (%p169) target = $region20
      $region19: #{unigin_conv.5} parent=5 // pred_region
        // Predicated region
        $region21: #{unigin_conv.5} parent=19 // pred_check
          %p172 = pneg %p66
        $region22: #{unigin_conv.5} parent=19 // pred_check_branch
          %174 = sbr.rel (%p172) target = $region24
        $region23: #{unigin_conv.5} parent=19 // pred_region
          %s175 = sand.u32 %s56, 1
          %s176 = sand.u32 %s56, 1
          %s177 = smul.addr %s176, 64
          %s178 = scalar_lea.vmem [#allocation4], %s177
          %s179 = smul.u32 16, %s18
          %s180 = smul.addr %s179, 2
          %s181 = sadd.s32 %s19, %s180
          %s182 = smul.addr %s181, 4
          %s183 = scalar_lea.vmem %s1, %s182
          // Predicated region
          $region25: #{unigin_conv.5} parent=23 // pred_check
            _
          $region26: #{unigin_conv.5} parent=23 // pred_check_branch
            %185 = sbr.rel (0) target = $region28
          $region27: #{unigin_conv.5} parent=23 // pred_region
            // Predicated region
            $region29: #{unigin_conv.5} parent=27 // pred_check
              _
            $region30: #{unigin_conv.5} parent=27 // pred_check_branch
              %187 = sbr.rel target = $region32
            $region31: #{unigin_conv.5} parent=27 // pred_region
              // Predicated region
              $region44: #{unigin_conv.5} parent=31 // pred_check
                _
              $region45: #{unigin_conv.5} parent=31 // pred_check_branch
                %233 = sbr.rel (0) target = $region47
              $region46: #{unigin_conv.5} parent=31 // pred_region
                loop: start=0, step=1, limit=1
                $region48: #{unigin_conv.5} parent=46 // loop_pre_header
                  _
                $region49: #{unigin_conv.5} parent=46 // loop_header
                  %s235 = sphi 0, %s239
                  %p236 = scmp.ge.s32.totalorder %s235, 1
                  %s240 = sphi %s183, %s183
                  %s241 = sphi %s178, %s178
                $region50: #{unigin_conv.5} parent=46 // loop_header_branch
                  %238 = sbr.rel (%p236) target = $region54
                $region51: #{unigin_conv.5} parent=46 // loop_body
                  _
                $region52: #{unigin_conv.5} parent=46 // loop_footer
                  %s239 = sadd.s32 1, %s235
                $region53: #{unigin_conv.5} parent=46 // loop_footer_branch
                  %234 = sbr.rel target = $region49
                $region54: #{unigin_conv.5} parent=46 // loop_exit
                  _
                %s243 = ssub.s32 16, 1
                loop: start=0, step=1, limit=1
                $region55: #{unigin_conv.5} parent=46 // loop_pre_header
                  _
                $region56: #{unigin_conv.5} parent=46 // loop_header
                  %s245 = sphi 0, %s249
                  %p246 = scmp.ge.s32.totalorder %s245, 1
                  %s250 = sphi %s183, %s183
                  %s251 = sphi %s178, %s178
                $region57: #{unigin_conv.5} parent=46 // loop_header_branch
                  %248 = sbr.rel (%p246) target = $region61
                $region58: #{unigin_conv.5} parent=46 // loop_body
                  %v252 = vld [vmem:[%s250] sm:%s243]
                  %253 = vst [vmem:[%s251] sm:%s243] %v252
                  %v254 = vld [vmem:[%s250 + $0x8] sm:%s243]
                  %255 = vst [vmem:[%s251 + $0x4] sm:%s243] %v254
                  %v256 = vld [vmem:[%s250 + $0x10] sm:%s243]
                  %257 = vst [vmem:[%s251 + $0x8] sm:%s243] %v256
                  %v258 = vld [vmem:[%s250 + $0x18] sm:%s243]
                  %259 = vst [vmem:[%s251 + $0xc] sm:%s243] %v258
                  %v260 = vld [vmem:[%s250 + $0x20] sm:%s243]
                  %261 = vst [vmem:[%s251 + $0x10] sm:%s243] %v260
                  %v262 = vld [vmem:[%s250 + $0x28] sm:%s243]
                  %263 = vst [vmem:[%s251 + $0x14] sm:%s243] %v262
                  %v264 = vld [vmem:[%s250 + $0x30] sm:%s243]
                  %265 = vst [vmem:[%s251 + $0x18] sm:%s243] %v264
                  %v266 = vld [vmem:[%s250 + $0x38] sm:%s243]
                  %267 = vst [vmem:[%s251 + $0x1c] sm:%s243] %v266
                  %v268 = vld [vmem:[%s250 + $0x40] sm:%s243]
                  %269 = vst [vmem:[%s251 + $0x20] sm:%s243] %v268
                  %v270 = vld [vmem:[%s250 + $0x48] sm:%s243]
                  %271 = vst [vmem:[%s251 + $0x24] sm:%s243] %v270
                  %v272 = vld [vmem:[%s250 + $0x50] sm:%s243]
                  %273 = vst [vmem:[%s251 + $0x28] sm:%s243] %v272
                  %v274 = vld [vmem:[%s250 + $0x58] sm:%s243]
                  %275 = vst [vmem:[%s251 + $0x2c] sm:%s243] %v274
                  %v276 = vld [vmem:[%s250 + $0x60] sm:%s243]
                  %277 = vst [vmem:[%s251 + $0x30] sm:%s243] %v276
                  %v278 = vld [vmem:[%s250 + $0x68] sm:%s243]
                  %279 = vst [vmem:[%s251 + $0x34] sm:%s243] %v278
                  %v280 = vld [vmem:[%s250 + $0x70] sm:%s243]
                  %281 = vst [vmem:[%s251 + $0x38] sm:%s243] %v280
                  %v282 = vld [vmem:[%s250 + $0x78] sm:%s243]
                  %283 = vst [vmem:[%s251 + $0x3c] sm:%s243] %v282
                $region59: #{unigin_conv.5} parent=46 // loop_footer
                  %s249 = sadd.s32 1, %s245
                $region60: #{unigin_conv.5} parent=46 // loop_footer_branch
                  %244 = sbr.rel target = $region56
                $region61: #{unigin_conv.5} parent=46 // loop_exit
                  _
              $region47: #{unigin_conv.5} parent=31 // pred_fallthru
                _
            $region32: #{unigin_conv.5} parent=27 // pred_fallthru
              _
            // Predicated region
            $region33: #{unigin_conv.5} parent=27 // pred_check
              _
            $region34: #{unigin_conv.5} parent=27 // pred_check_branch
              %189 = sbr.rel (0) target = $region36
            $region35: #{unigin_conv.5} parent=27 // pred_region
              %s191 = ssub.s32 16, 1
              loop: start=0, step=1, limit=1
              $region37: #{unigin_conv.5} parent=35 // loop_pre_header
                _
              $region38: #{unigin_conv.5} parent=35 // loop_header
                %s193 = sphi 0, %s197
                %p194 = scmp.ge.s32.totalorder %s193, 1
                %s198 = sphi %s183, %s183
                %s199 = sphi %s178, %s178
              $region39: #{unigin_conv.5} parent=35 // loop_header_branch
                %196 = sbr.rel (%p194) target = $region43
              $region40: #{unigin_conv.5} parent=35 // loop_body
                %v200 = vld [vmem:[%s198] sm:%s191]
                %201 = vst [vmem:[%s199] sm:%s191] %v200
                %v202 = vld [vmem:[%s198 + $0x8] sm:%s191]
                %203 = vst [vmem:[%s199 + $0x4] sm:%s191] %v202
                %v204 = vld [vmem:[%s198 + $0x10] sm:%s191]
                %205 = vst [vmem:[%s199 + $0x8] sm:%s191] %v204
                %v206 = vld [vmem:[%s198 + $0x18] sm:%s191]
                %207 = vst [vmem:[%s199 + $0xc] sm:%s191] %v206
                %v208 = vld [vmem:[%s198 + $0x20] sm:%s191]
                %209 = vst [vmem:[%s199 + $0x10] sm:%s191] %v208
                %v210 = vld [vmem:[%s198 + $0x28] sm:%s191]
                %211 = vst [vmem:[%s199 + $0x14] sm:%s191] %v210
                %v212 = vld [vmem:[%s198 + $0x30] sm:%s191]
                %213 = vst [vmem:[%s199 + $0x18] sm:%s191] %v212
                %v214 = vld [vmem:[%s198 + $0x38] sm:%s191]
                %215 = vst [vmem:[%s199 + $0x1c] sm:%s191] %v214
                %v216 = vld [vmem:[%s198 + $0x40] sm:%s191]
                %217 = vst [vmem:[%s199 + $0x20] sm:%s191] %v216
                %v218 = vld [vmem:[%s198 + $0x48] sm:%s191]
                %219 = vst [vmem:[%s199 + $0x24] sm:%s191] %v218
                %v220 = vld [vmem:[%s198 + $0x50] sm:%s191]
                %221 = vst [vmem:[%s199 + $0x28] sm:%s191] %v220
                %v222 = vld [vmem:[%s198 + $0x58] sm:%s191]
                %223 = vst [vmem:[%s199 + $0x2c] sm:%s191] %v222
                %v224 = vld [vmem:[%s198 + $0x60] sm:%s191]
                %225 = vst [vmem:[%s199 + $0x30] sm:%s191] %v224
                %v226 = vld [vmem:[%s198 + $0x68] sm:%s191]
                %227 = vst [vmem:[%s199 + $0x34] sm:%s191] %v226
                %v228 = vld [vmem:[%s198 + $0x70] sm:%s191]
                %229 = vst [vmem:[%s199 + $0x38] sm:%s191] %v228
                %v230 = vld [vmem:[%s198 + $0x78] sm:%s191]
                %231 = vst [vmem:[%s199 + $0x3c] sm:%s191] %v230
              $region41: #{unigin_conv.5} parent=35 // loop_footer
                %s197 = sadd.s32 1, %s193
              $region42: #{unigin_conv.5} parent=35 // loop_footer_branch
                %192 = sbr.rel target = $region38
              $region43: #{unigin_conv.5} parent=35 // loop_exit
                _
            $region36: #{unigin_conv.5} parent=27 // pred_fallthru
              _
          $region28: #{unigin_conv.5} parent=23 // pred_fallthru
            _
          %284 = vnop
        $region24: #{unigin_conv.5} parent=19 // pred_fallthru
          _
        // Predicated region
        $region62: #{unigin_conv.5} parent=19 // pred_check
          %p285 = pneg %p92
        $region63: #{unigin_conv.5} parent=19 // pred_check_branch
          %287 = sbr.rel (%p285) target = $region65
        $region64: #{unigin_conv.5} parent=19 // pred_region
          %s288 = smul.u32 16, %s19
          %p289 = scmp.lt.s32.totalorder %s288, 31
          %s290 = scalar_select %p289, %s288, 31
          %s291 = smul.addr %s290, 4
          %s292 = scalar_lea.vmem %s2, %s291
          %s293 = smul.u32 16, %s19
        $region65: #{unigin_conv.5} parent=19 // pred_fallthru
          _
        // Predicated region
        $region66: #{unigin_conv.5} parent=19 // pred_check
          %p294 = pneg %p118
        $region67: #{unigin_conv.5} parent=19 // pred_check_branch
          %296 = sbr.rel (%p294) target = $region69
        $region68: #{unigin_conv.5} parent=19 // pred_region
          %s297 = smul.u32 16, %s18
          %p298 = scmp.lt.s32.totalorder %s297, 31
          %s299 = scalar_select %p298, %s297, 31
          %s300 = smul.addr %s299, 8
          %s301 = scalar_lea.vmem %s3, %s300
          %s302 = smul.u32 16, %s18
        $region69: #{unigin_conv.5} parent=19 // pred_fallthru
          _
      $region20: #{unigin_conv.5} parent=5 // pred_fallthru
        _
      %p303 = scmp.le.s32.totalorder 1, %s11
      %p304 = scmp.lt.s32.totalorder %s11, 5
      %p305 = pnand %p303, %p304
      %p306 = pneg %p305
      // Predicated region
      $region70: #{unigin_conv.5} parent=5 // pred_check
        _
      $region71: #{unigin_conv.5} parent=5 // pred_check_branch
        %308 = sbr.rel (%p305) target = $region73
      $region72: #{unigin_conv.5} parent=5 // pred_region
        %s309 = ssub.s32 %s11, 1
        %s310 = sand.u32 %s59, 1
        %s311 = sand.u32 %s59, 1
        %s312 = smul.addr %s311, 64
        %s313 = scalar_lea.vmem [#allocation4], %s312
        // Predicated region
        $region74: #{unigin_conv.5} parent=72 // pred_check
          %p314 = pneg %p72
        $region75: #{unigin_conv.5} parent=72 // pred_check_branch
          %316 = sbr.rel (%p314) target = $region77
        $region76: #{unigin_conv.5} parent=72 // pred_region
          _
        $region77: #{unigin_conv.5} parent=72 // pred_fallthru
          _
        %p317 = pneg %p44
        %p318 = pneg %p41
        %s319 = sand.u32 %s59, 1
        %s320 = sand.u32 %s59, 1
        %s321 = smul.addr %s320, 64
        %s322 = scalar_lea.vmem [#allocation4], %s321
        %p323 = pneg %p72
        %p324 = pneg %p69
        %s325 = smul.u32 16, %s21
        %p326 = scmp.lt.s32.totalorder %s325, 31
        %s327 = scalar_select %p326, %s325, 31
        %s328 = smul.addr %s327, 4
        %s329 = scalar_lea.vmem %s2, %s328
        %p330 = pneg %p98
        %p331 = pneg %p95
        %s332 = smul.u32 16, %s20
        %p333 = scmp.lt.s32.totalorder %s332, 31
        %s334 = scalar_select %p333, %s332, 31
        %s335 = smul.addr %s334, 8
        %s336 = scalar_lea.vmem %s3, %s335
        %p337 = pneg %p124
        %p338 = pneg %p121
        %p339 = pneg %p150
        %p340 = pneg %p147
        %s341 = smul.u32 16, %s20
        %p342 = scmp.lt.s32.totalorder %s341, 31
        %s343 = scalar_select %p342, %s341, 31
        %s344 = smul.addr %s343, 8
        %s345 = scalar_lea.vmem %s4, %s344
        %s346 = smul.u32 16, %s20
        %s347 = smul.u32 16, %s21
        %p348 = scmp.lt.s32.totalorder %s347, 31
        %s349 = scalar_select %p348, %s347, 31
        %s350 = smul.addr %s349, 4
        %s351 = scalar_lea.vmem %s2, %s350
        %s352 = smul.u32 16, %s21
        %s353 = smul.u32 16, %s20
        %p354 = scmp.lt.s32.totalorder %s353, 31
        %s355 = scalar_select %p354, %s353, 31
        %s356 = smul.addr %s355, 8
        %s357 = scalar_lea.vmem %s3, %s356
        %s358 = smul.u32 16, %s20
        %s359 = smul.u32 16, %s20
        %p360 = scmp.lt.s32.totalorder %s359, 31
        %s361 = scalar_select %p360, %s359, 31
        %s362 = smul.addr %s361, 8
        %s363 = scalar_lea.vmem %s4, %s362
        %s364 = smul.u32 16, %s20
        %p365 = scmp.eq.s32.totalorder %s21, 0
        // Predicated region
        $region78: #{unigin_conv.5} parent=72 // pred_check
          %p366 = pneg %p365
        $region79: #{unigin_conv.5} parent=72 // pred_check_branch
          %368 = sbr.rel (%p366) target = $region81
        $region80: #{unigin_conv.5} parent=72 // pred_region
          %369 = vst [vmem:[#allocation2] sm:$0xff] 0.0
          %370 = vst [vmem:[#allocation2 + $0x8] sm:$0xff] 0.0
          %371 = vst [vmem:[#allocation2 + $0x10] sm:$0xff] 0.0
          %372 = vst [vmem:[#allocation2 + $0x18] sm:$0xff] 0.0
          %373 = vst [vmem:[#allocation2 + $0x20] sm:$0xff] 0.0
          %374 = vst [vmem:[#allocation2 + $0x28] sm:$0xff] 0.0
          %375 = vst [vmem:[#allocation2 + $0x30] sm:$0xff] 0.0
          %376 = vst [vmem:[#allocation2 + $0x38] sm:$0xff] 0.0
          %377 = vst [vmem:[#allocation2 + $0x40] sm:$0xff] 0.0
          %378 = vst [vmem:[#allocation2 + $0x48] sm:$0xff] 0.0
          %379 = vst [vmem:[#allocation2 + $0x50] sm:$0xff] 0.0
          %380 = vst [vmem:[#allocation2 + $0x58] sm:$0xff] 0.0
          %381 = vst [vmem:[#allocation2 + $0x60] sm:$0xff] 0.0
          %382 = vst [vmem:[#allocation2 + $0x68] sm:$0xff] 0.0
          %383 = vst [vmem:[#allocation2 + $0x70] sm:$0xff] 0.0
          %384 = vst [vmem:[#allocation2 + $0x78] sm:$0xff] 0.0
        $region81: #{unigin_conv.5} parent=72 // pred_fallthru
          _
        %v385 = vld [vmem:[#allocation2] sm:$0xff]
        %v386 = vld [vmem:[#allocation2 + $0x8] sm:$0xff]
        %v387 = vld [vmem:[#allocation2 + $0x10] sm:$0xff]
        %v388 = vld [vmem:[#allocation2 + $0x18] sm:$0xff]
        %v389 = vld [vmem:[#allocation2 + $0x20] sm:$0xff]
        %v390 = vld [vmem:[#allocation2 + $0x28] sm:$0xff]
        %v391 = vld [vmem:[#allocation2 + $0x30] sm:$0xff]
        %v392 = vld [vmem:[#allocation2 + $0x38] sm:$0xff]
        %v393 = vld [vmem:[#allocation2 + $0x40] sm:$0xff]
        %v394 = vld [vmem:[#allocation2 + $0x48] sm:$0xff]
        %v395 = vld [vmem:[#allocation2 + $0x50] sm:$0xff]
        %v396 = vld [vmem:[#allocation2 + $0x58] sm:$0xff]
        %v397 = vld [vmem:[#allocation2 + $0x60] sm:$0xff]
        %v398 = vld [vmem:[#allocation2 + $0x68] sm:$0xff]
        %v399 = vld [vmem:[#allocation2 + $0x70] sm:$0xff]
        %v400 = vld [vmem:[#allocation2 + $0x78] sm:$0xff]
        %v401 = vld [vmem:[%s313] sm:$0xf]
        %v402 = vld [vmem:[%s313 + $0x4] sm:$0xf]
        %v403 = vld [vmem:[%s313 + $0x8] sm:$0xf]
        %v404 = vld [vmem:[%s313 + $0xc] sm:$0xf]
        %v405 = vld [vmem:[%s313 + $0x10] sm:$0xf]
        %v406 = vld [vmem:[%s313 + $0x14] sm:$0xf]
        %v407 = vld [vmem:[%s313 + $0x18] sm:$0xf]
        %v408 = vld [vmem:[%s313 + $0x1c] sm:$0xf]
        %v409 = vld [vmem:[%s313 + $0x20] sm:$0xf]
        %v410 = vld [vmem:[%s313 + $0x24] sm:$0xf]
        %v411 = vld [vmem:[%s313 + $0x28] sm:$0xf]
        %v412 = vld [vmem:[%s313 + $0x2c] sm:$0xf]
        %v413 = vld [vmem:[%s313 + $0x30] sm:$0xf]
        %v414 = vld [vmem:[%s313 + $0x34] sm:$0xf]
        %v415 = vld [vmem:[%s313 + $0x38] sm:$0xf]
        %v416 = vld [vmem:[%s313 + $0x3c] sm:$0xf]
        %v417 = vld [vmem:[%s351] sm:$0xf]
        %v418 = vld [vmem:[%s351 + $0x4] sm:$0xf]
        %v419 = vld [vmem:[%s351 + $0x8] sm:$0xf]
        %v420 = vld [vmem:[%s351 + $0xc] sm:$0xf]
        %v421 = vld [vmem:[%s351 + $0x10] sm:$0xf]
        %v422 = vld [vmem:[%s351 + $0x14] sm:$0xf]
        %v423 = vld [vmem:[%s351 + $0x18] sm:$0xf]
        %v424 = vld [vmem:[%s351 + $0x1c] sm:$0xf]
        %v425 = vld [vmem:[%s351 + $0x20] sm:$0xf]
        %v426 = vld [vmem:[%s351 + $0x24] sm:$0xf]
        %v427 = vld [vmem:[%s351 + $0x28] sm:$0xf]
        %v428 = vld [vmem:[%s351 + $0x2c] sm:$0xf]
        %v429 = vld [vmem:[%s351 + $0x30] sm:$0xf]
        %v430 = vld [vmem:[%s351 + $0x34] sm:$0xf]
        %v431 = vld [vmem:[%s351 + $0x38] sm:$0xf]
        %v432 = vld [vmem:[%s351 + $0x3c] sm:$0xf]
        %v449 = vunpack.c.l.b16 %v401
        %v450 = vunpack.c.l.b16 %v402
        %v451 = vunpack.c.l.b16 %v403
        %v452 = vunpack.c.l.b16 %v404
        %v453 = vunpack.c.l.b16 %v405
        %v454 = vunpack.c.l.b16 %v406
        %v455 = vunpack.c.l.b16 %v407
        %v456 = vunpack.c.l.b16 %v408
        %v457 = vunpack.c.l.b16 %v409
        %v458 = vunpack.c.l.b16 %v410
        %v459 = vunpack.c.l.b16 %v411
        %v460 = vunpack.c.l.b16 %v412
        %v461 = vunpack.c.l.b16 %v413
        %v462 = vunpack.c.l.b16 %v414
        %v463 = vunpack.c.l.b16 %v415
        %v464 = vunpack.c.l.b16 %v416
        %v465 = vpack.c.b16 %v450, %v449
        %v466 = vpack.c.b16 %v452, %v451
        %v467 = vpack.c.b16 %v454, %v453
        %v468 = vpack.c.b16 %v456, %v455
        %v469 = vpack.c.b16 %v458, %v457
        %v470 = vpack.c.b16 %v460, %v459
        %v471 = vpack.c.b16 %v462, %v461
        %v472 = vpack.c.b16 %v464, %v463
        %v497 = vunpack.c.l.b16 %v417
        %v498 = vunpack.c.l.b16 %v418
        %v499 = vunpack.c.l.b16 %v419
        %v500 = vunpack.c.l.b16 %v420
        %v501 = vunpack.c.l.b16 %v421
        %v502 = vunpack.c.l.b16 %v422
        %v503 = vunpack.c.l.b16 %v423
        %v504 = vunpack.c.l.b16 %v424
        %v505 = vunpack.c.l.b16 %v425
        %v506 = vunpack.c.l.b16 %v426
        %v507 = vunpack.c.l.b16 %v427
        %v508 = vunpack.c.l.b16 %v428
        %v509 = vunpack.c.l.b16 %v429
        %v510 = vunpack.c.l.b16 %v430
        %v511 = vunpack.c.l.b16 %v431
        %v512 = vunpack.c.l.b16 %v432
        %v513 = vpack.c.b16 %v498, %v497
        %v514 = vpack.c.b16 %v500, %v499
        %v515 = vpack.c.b16 %v502, %v501
        %v516 = vpack.c.b16 %v504, %v503
        %v517 = vpack.c.b16 %v506, %v505
        %v518 = vpack.c.b16 %v508, %v507
        %v519 = vpack.c.b16 %v510, %v509
        %v520 = vpack.c.b16 %v512, %v511
        %529 = vmatpush.bf16.msra.mxu0 %v520
        %530 = vmatpush.bf16.msra.mxu0 %v519
        %531 = vmatpush.bf16.msra.mxu0 %v518
        %532 = vmatpush.bf16.msra.mxu0 %v517
        %533 = vmatpush.bf16.msra.mxu0 %v516
        %534 = vmatpush.bf16.msra.mxu0 %v515
        %535 = vmatpush.bf16.msra.mxu0 %v514
        %536 = vmatpush.bf16.msra.mxu0 %v513
        %537 = vmatmul.bf16.gmra.mxu0 %v465
        %v538 = vpop.f32.mrf.mxu0
        %v539 = vadd.f32 0.0, %v538
        %v540 = vpop.f32.mrf.mxu0
        %v541 = vadd.f32 0.0, %v540
        %542 = vmatmul.bf16.gmra.mxu0 %v466
        %v543 = vpop.f32.mrf.mxu0
        %v544 = vadd.f32 0.0, %v543
        %v545 = vpop.f32.mrf.mxu0
        %v546 = vadd.f32 0.0, %v545
        %547 = vmatmul.bf16.gmra.mxu0 %v467
        %v548 = vpop.f32.mrf.mxu0
        %v549 = vadd.f32 0.0, %v548
        %v550 = vpop.f32.mrf.mxu0
        %v551 = vadd.f32 0.0, %v550
        %552 = vmatmul.bf16.gmra.mxu0 %v468
        %v553 = vpop.f32.mrf.mxu0
        %v554 = vadd.f32 0.0, %v553
        %v555 = vpop.f32.mrf.mxu0
        %v556 = vadd.f32 0.0, %v555
        %557 = vmatmul.bf16.gmra.mxu0 %v469
        %v558 = vpop.f32.mrf.mxu0
        %v559 = vadd.f32 0.0, %v558
        %v560 = vpop.f32.mrf.mxu0
        %v561 = vadd.f32 0.0, %v560
        %562 = vmatmul.bf16.gmra.mxu0 %v470
        %v563 = vpop.f32.mrf.mxu0
        %v564 = vadd.f32 0.0, %v563
        %v565 = vpop.f32.mrf.mxu0
        %v566 = vadd.f32 0.0, %v565
        %567 = vmatmul.bf16.gmra.mxu0 %v471
        %v568 = vpop.f32.mrf.mxu0
        %v569 = vadd.f32 0.0, %v568
        %v570 = vpop.f32.mrf.mxu0
        %v571 = vadd.f32 0.0, %v570
        %572 = vmatmul.bf16.gmra.mxu0 %v472
        %v573 = vpop.f32.mrf.mxu0
        %v574 = vadd.f32 0.0, %v573
        %v575 = vpop.f32.mrf.mxu0
        %v576 = vadd.f32 0.0, %v575
        %577 = vdwg.mxu0
        %v578 = vadd.f32 %v385, %v539
        %v579 = vadd.f32 %v386, %v541
        %v580 = vadd.f32 %v387, %v544
        %v581 = vadd.f32 %v388, %v546
        %v582 = vadd.f32 %v389, %v549
        %v583 = vadd.f32 %v390, %v551
        %v584 = vadd.f32 %v391, %v554
        %v585 = vadd.f32 %v392, %v556
        %v586 = vadd.f32 %v393, %v559
        %v587 = vadd.f32 %v394, %v561
        %v588 = vadd.f32 %v395, %v564
        %v589 = vadd.f32 %v396, %v566
        %v590 = vadd.f32 %v397, %v569
        %v591 = vadd.f32 %v398, %v571
        %v592 = vadd.f32 %v399, %v574
        %v593 = vadd.f32 %v400, %v576
        %594 = vst [vmem:[#allocation2] sm:$0xff] %v578
        %595 = vst [vmem:[#allocation2 + $0x8] sm:$0xff] %v579
        %596 = vst [vmem:[#allocation2 + $0x10] sm:$0xff] %v580
        %597 = vst [vmem:[#allocation2 + $0x18] sm:$0xff] %v581
        %598 = vst [vmem:[#allocation2 + $0x20] sm:$0xff] %v582
        %599 = vst [vmem:[#allocation2 + $0x28] sm:$0xff] %v583
        %600 = vst [vmem:[#allocation2 + $0x30] sm:$0xff] %v584
        %601 = vst [vmem:[#allocation2 + $0x38] sm:$0xff] %v585
        %602 = vst [vmem:[#allocation2 + $0x40] sm:$0xff] %v586
        %603 = vst [vmem:[#allocation2 + $0x48] sm:$0xff] %v587
        %604 = vst [vmem:[#allocation2 + $0x50] sm:$0xff] %v588
        %605 = vst [vmem:[#allocation2 + $0x58] sm:$0xff] %v589
        %606 = vst [vmem:[#allocation2 + $0x60] sm:$0xff] %v590
        %607 = vst [vmem:[#allocation2 + $0x68] sm:$0xff] %v591
        %608 = vst [vmem:[#allocation2 + $0x70] sm:$0xff] %v592
        %609 = vst [vmem:[#allocation2 + $0x78] sm:$0xff] %v593
        %p610 = scmp.eq.s32.totalorder %s21, 1
        // Predicated region
        $region82: #{unigin_conv.5} parent=72 // pred_check
          %p611 = pneg %p610
        $region83: #{unigin_conv.5} parent=72 // pred_check_branch
          %613 = sbr.rel (%p611) target = $region85
        $region84: #{unigin_conv.5} parent=72 // pred_region
          %s614 = sld [smem:[#allocation3]]
          %s615 = sadd.f32 %s614, 1.0
          %v616 = vld [vmem:[%s357] sm:$0xff]
          %v617 = vld [vmem:[%s357 + $0x8] sm:$0xff]
          %v618 = vld [vmem:[%s357 + $0x10] sm:$0xff]
          %v619 = vld [vmem:[%s357 + $0x18] sm:$0xff]
          %v620 = vld [vmem:[%s357 + $0x20] sm:$0xff]
          %v621 = vld [vmem:[%s357 + $0x28] sm:$0xff]
          %v622 = vld [vmem:[%s357 + $0x30] sm:$0xff]
          %v623 = vld [vmem:[%s357 + $0x38] sm:$0xff]
          %v624 = vld [vmem:[%s357 + $0x40] sm:$0xff]
          %v625 = vld [vmem:[%s357 + $0x48] sm:$0xff]
          %v626 = vld [vmem:[%s357 + $0x50] sm:$0xff]
          %v627 = vld [vmem:[%s357 + $0x58] sm:$0xff]
          %v628 = vld [vmem:[%s357 + $0x60] sm:$0xff]
          %v629 = vld [vmem:[%s357 + $0x68] sm:$0xff]
          %v630 = vld [vmem:[%s357 + $0x70] sm:$0xff]
          %v631 = vld [vmem:[%s357 + $0x78] sm:$0xff]
          %v632 = vstv %s615
          %v633 = vmul.f32 %v632, %v616
          %v634 = vmul.f32 %v632, %v617
          %v635 = vmul.f32 %v632, %v618
          %v636 = vmul.f32 %v632, %v619
          %v637 = vmul.f32 %v632, %v620
          %v638 = vmul.f32 %v632, %v621
          %v639 = vmul.f32 %v632, %v622
          %v640 = vmul.f32 %v632, %v623
          %v641 = vmul.f32 %v632, %v624
          %v642 = vmul.f32 %v632, %v625
          %v643 = vmul.f32 %v632, %v626
          %v644 = vmul.f32 %v632, %v627
          %v645 = vmul.f32 %v632, %v628
          %v646 = vmul.f32 %v632, %v629
          %v647 = vmul.f32 %v632, %v630
          %v648 = vmul.f32 %v632, %v631
          %v649 = vld [vmem:[#allocation2] sm:$0xff]
          %v650 = vld [vmem:[#allocation2 + $0x8] sm:$0xff]
          %v651 = vld [vmem:[#allocation2 + $0x10] sm:$0xff]
          %v652 = vld [vmem:[#allocation2 + $0x18] sm:$0xff]
          %v653 = vld [vmem:[#allocation2 + $0x20] sm:$0xff]
          %v654 = vld [vmem:[#allocation2 + $0x28] sm:$0xff]
          %v655 = vld [vmem:[#allocation2 + $0x30] sm:$0xff]
          %v656 = vld [vmem:[#allocation2 + $0x38] sm:$0xff]
          %v657 = vld [vmem:[#allocation2 + $0x40] sm:$0xff]
          %v658 = vld [vmem:[#allocation2 + $0x48] sm:$0xff]
          %v659 = vld [vmem:[#allocation2 + $0x50] sm:$0xff]
          %v660 = vld [vmem:[#allocation2 + $0x58] sm:$0xff]
          %v661 = vld [vmem:[#allocation2 + $0x60] sm:$0xff]
          %v662 = vld [vmem:[#allocation2 + $0x68] sm:$0xff]
          %v663 = vld [vmem:[#allocation2 + $0x70] sm:$0xff]
          %v664 = vld [vmem:[#allocation2 + $0x78] sm:$0xff]
          %v665 = vadd.f32 %v633, %v649
          %v666 = vadd.f32 %v634, %v650
          %v667 = vadd.f32 %v635, %v651
          %v668 = vadd.f32 %v636, %v652
          %v669 = vadd.f32 %v637, %v653
          %v670 = vadd.f32 %v638, %v654
          %v671 = vadd.f32 %v639, %v655
          %v672 = vadd.f32 %v640, %v656
          %v673 = vadd.f32 %v641, %v657
          %v674 = vadd.f32 %v642, %v658
          %v675 = vadd.f32 %v643, %v659
          %v676 = vadd.f32 %v644, %v660
          %v677 = vadd.f32 %v645, %v661
          %v678 = vadd.f32 %v646, %v662
          %v679 = vadd.f32 %v647, %v663
          %v680 = vadd.f32 %v648, %v664
          %v681 = vmul.f32 %v665, %v665
          %v682 = vmul.f32 %v666, %v666
          %v683 = vmul.f32 %v667, %v667
          %v684 = vmul.f32 %v668, %v668
          %v685 = vmul.f32 %v669, %v669
          %v686 = vmul.f32 %v670, %v670
          %v687 = vmul.f32 %v671, %v671
          %v688 = vmul.f32 %v672, %v672
          %v689 = vmul.f32 %v673, %v673
          %v690 = vmul.f32 %v674, %v674
          %v691 = vmul.f32 %v675, %v675
          %v692 = vmul.f32 %v676, %v676
          %v693 = vmul.f32 %v677, %v677
          %v694 = vmul.f32 %v678, %v678
          %v695 = vmul.f32 %v679, %v679
          %v696 = vmul.f32 %v680, %v680
          %697 = vadd.xlane.f32.xlu0 %v681
          %v698 = vpop.xlane.xlu0 %697
          %699 = vadd.xlane.f32.xlu0 %v682
          %v700 = vpop.xlane.xlu0 %699
          %701 = vadd.xlane.f32.xlu0 %v683
          %v702 = vpop.xlane.xlu0 %701
          %703 = vadd.xlane.f32.xlu0 %v684
          %v704 = vpop.xlane.xlu0 %703
          %705 = vadd.xlane.f32.xlu0 %v685
          %v706 = vpop.xlane.xlu0 %705
          %707 = vadd.xlane.f32.xlu0 %v686
          %v708 = vpop.xlane.xlu0 %707
          %709 = vadd.xlane.f32.xlu0 %v687
          %v710 = vpop.xlane.xlu0 %709
          %711 = vadd.xlane.f32.xlu0 %v688
          %v712 = vpop.xlane.xlu0 %711
          %713 = vadd.xlane.f32.xlu0 %v689
          %v714 = vpop.xlane.xlu0 %713
          %715 = vadd.xlane.f32.xlu0 %v690
          %v716 = vpop.xlane.xlu0 %715
          %717 = vadd.xlane.f32.xlu0 %v691
          %v718 = vpop.xlane.xlu0 %717
          %719 = vadd.xlane.f32.xlu0 %v692
          %v720 = vpop.xlane.xlu0 %719
          %721 = vadd.xlane.f32.xlu0 %v693
          %v722 = vpop.xlane.xlu0 %721
          %723 = vadd.xlane.f32.xlu0 %v694
          %v724 = vpop.xlane.xlu0 %723
          %725 = vadd.xlane.f32.xlu0 %v695
          %v726 = vpop.xlane.xlu0 %725
          %727 = vadd.xlane.f32.xlu0 %v696
          %v728 = vpop.xlane.xlu0 %727
          %vm729 = vcmp.gt.f32.partialorder %v698, 0.0
          %vm730 = vcmp.gt.f32.partialorder %v700, 0.0
          %vm731 = vcmp.gt.f32.partialorder %v702, 0.0
          %vm732 = vcmp.gt.f32.partialorder %v704, 0.0
          %vm733 = vcmp.gt.f32.partialorder %v706, 0.0
          %vm734 = vcmp.gt.f32.partialorder %v708, 0.0
          %vm735 = vcmp.gt.f32.partialorder %v710, 0.0
          %vm736 = vcmp.gt.f32.partialorder %v712, 0.0
          %vm737 = vcmp.gt.f32.partialorder %v714, 0.0
          %vm738 = vcmp.gt.f32.partialorder %v716, 0.0
          %vm739 = vcmp.gt.f32.partialorder %v718, 0.0
          %vm740 = vcmp.gt.f32.partialorder %v720, 0.0
          %vm741 = vcmp.gt.f32.partialorder %v722, 0.0
          %vm742 = vcmp.gt.f32.partialorder %v724, 0.0
          %vm743 = vcmp.gt.f32.partialorder %v726, 0.0
          %vm744 = vcmp.gt.f32.partialorder %v728, 0.0
          %v745 = vrsqrt.pop %v698
          %v746 = vmul.f32 %v745, %v698
          %v747 = vmul.f32 %v746, %v745
          %v748 = vmul.f32 0.5, %v747
          %v749 = vsub.f32 1.5, %v748
          %v750 = vmul.f32 %v745, %v749
          %vm751 = vweird.f32 %v698
          %vm752 = vweird.f32 %v745
          %vm753 = vmor %vm751, %vm752
          %v754 = vsel %vm753, %v745, %v750
          %v755 = vrsqrt.pop %v700
          %v756 = vmul.f32 %v755, %v700
          %v757 = vmul.f32 %v756, %v755
          %v758 = vmul.f32 0.5, %v757
          %v759 = vsub.f32 1.5, %v758
          %v760 = vmul.f32 %v755, %v759
          %vm761 = vweird.f32 %v700
          %vm762 = vweird.f32 %v755
          %vm763 = vmor %vm761, %vm762
          %v764 = vsel %vm763, %v755, %v760
          %v765 = vrsqrt.pop %v702
          %v766 = vmul.f32 %v765, %v702
          %v767 = vmul.f32 %v766, %v765
          %v768 = vmul.f32 0.5, %v767
          %v769 = vsub.f32 1.5, %v768
          %v770 = vmul.f32 %v765, %v769
          %vm771 = vweird.f32 %v702
          %vm772 = vweird.f32 %v765
          %vm773 = vmor %vm771, %vm772
          %v774 = vsel %vm773, %v765, %v770
          %v775 = vrsqrt.pop %v704
          %v776 = vmul.f32 %v775, %v704
          %v777 = vmul.f32 %v776, %v775
          %v778 = vmul.f32 0.5, %v777
          %v779 = vsub.f32 1.5, %v778
          %v780 = vmul.f32 %v775, %v779
          %vm781 = vweird.f32 %v704
          %vm782 = vweird.f32 %v775
          %vm783 = vmor %vm781, %vm782
          %v784 = vsel %vm783, %v775, %v780
          %v785 = vrsqrt.pop %v706
          %v786 = vmul.f32 %v785, %v706
          %v787 = vmul.f32 %v786, %v785
          %v788 = vmul.f32 0.5, %v787
          %v789 = vsub.f32 1.5, %v788
          %v790 = vmul.f32 %v785, %v789
          %vm791 = vweird.f32 %v706
          %vm792 = vweird.f32 %v785
          %vm793 = vmor %vm791, %vm792
          %v794 = vsel %vm793, %v785, %v790
          %v795 = vrsqrt.pop %v708
          %v796 = vmul.f32 %v795, %v708
          %v797 = vmul.f32 %v796, %v795
          %v798 = vmul.f32 0.5, %v797
          %v799 = vsub.f32 1.5, %v798
          %v800 = vmul.f32 %v795, %v799
          %vm801 = vweird.f32 %v708
          %vm802 = vweird.f32 %v795
          %vm803 = vmor %vm801, %vm802
          %v804 = vsel %vm803, %v795, %v800
          %v805 = vrsqrt.pop %v710
          %v806 = vmul.f32 %v805, %v710
          %v807 = vmul.f32 %v806, %v805
          %v808 = vmul.f32 0.5, %v807
          %v809 = vsub.f32 1.5, %v808
          %v810 = vmul.f32 %v805, %v809
          %vm811 = vweird.f32 %v710
          %vm812 = vweird.f32 %v805
          %vm813 = vmor %vm811, %vm812
          %v814 = vsel %vm813, %v805, %v810
          %v815 = vrsqrt.pop %v712
          %v816 = vmul.f32 %v815, %v712
          %v817 = vmul.f32 %v816, %v815
          %v818 = vmul.f32 0.5, %v817
          %v819 = vsub.f32 1.5, %v818
          %v820 = vmul.f32 %v815, %v819
          %vm821 = vweird.f32 %v712
          %vm822 = vweird.f32 %v815
          %vm823 = vmor %vm821, %vm822
          %v824 = vsel %vm823, %v815, %v820
          %v825 = vrsqrt.pop %v714
          %v826 = vmul.f32 %v825, %v714
          %v827 = vmul.f32 %v826, %v825
          %v828 = vmul.f32 0.5, %v827
          %v829 = vsub.f32 1.5, %v828
          %v830 = vmul.f32 %v825, %v829
          %vm831 = vweird.f32 %v714
          %vm832 = vweird.f32 %v825
          %vm833 = vmor %vm831, %vm832
          %v834 = vsel %vm833, %v825, %v830
          %v835 = vrsqrt.pop %v716
          %v836 = vmul.f32 %v835, %v716
          %v837 = vmul.f32 %v836, %v835
          %v838 = vmul.f32 0.5, %v837
          %v839 = vsub.f32 1.5, %v838
          %v840 = vmul.f32 %v835, %v839
          %vm841 = vweird.f32 %v716
          %vm842 = vweird.f32 %v835
          %vm843 = vmor %vm841, %vm842
          %v844 = vsel %vm843, %v835, %v840
          %v845 = vrsqrt.pop %v718
          %v846 = vmul.f32 %v845, %v718
          %v847 = vmul.f32 %v846, %v845
          %v848 = vmul.f32 0.5, %v847
          %v849 = vsub.f32 1.5, %v848
          %v850 = vmul.f32 %v845, %v849
          %vm851 = vweird.f32 %v718
          %vm852 = vweird.f32 %v845
          %vm853 = vmor %vm851, %vm852
          %v854 = vsel %vm853, %v845, %v850
          %v855 = vrsqrt.pop %v720
          %v856 = vmul.f32 %v855, %v720
          %v857 = vmul.f32 %v856, %v855
          %v858 = vmul.f32 0.5, %v857
          %v859 = vsub.f32 1.5, %v858
          %v860 = vmul.f32 %v855, %v859
          %vm861 = vweird.f32 %v720
          %vm862 = vweird.f32 %v855
          %vm863 = vmor %vm861, %vm862
          %v864 = vsel %vm863, %v855, %v860
          %v865 = vrsqrt.pop %v722
          %v866 = vmul.f32 %v865, %v722
          %v867 = vmul.f32 %v866, %v865
          %v868 = vmul.f32 0.5, %v867
          %v869 = vsub.f32 1.5, %v868
          %v870 = vmul.f32 %v865, %v869
          %vm871 = vweird.f32 %v722
          %vm872 = vweird.f32 %v865
          %vm873 = vmor %vm871, %vm872
          %v874 = vsel %vm873, %v865, %v870
          %v875 = vrsqrt.pop %v724
          %v876 = vmul.f32 %v875, %v724
          %v877 = vmul.f32 %v876, %v875
          %v878 = vmul.f32 0.5, %v877
          %v879 = vsub.f32 1.5, %v878
          %v880 = vmul.f32 %v875, %v879
          %vm881 = vweird.f32 %v724
          %vm882 = vweird.f32 %v875
          %vm883 = vmor %vm881, %vm882
          %v884 = vsel %vm883, %v875, %v880
          %v885 = vrsqrt.pop %v726
          %v886 = vmul.f32 %v885, %v726
          %v887 = vmul.f32 %v886, %v885
          %v888 = vmul.f32 0.5, %v887
          %v889 = vsub.f32 1.5, %v888
          %v890 = vmul.f32 %v885, %v889
          %vm891 = vweird.f32 %v726
          %vm892 = vweird.f32 %v885
          %vm893 = vmor %vm891, %vm892
          %v894 = vsel %vm893, %v885, %v890
          %v895 = vrsqrt.pop %v728
          %v896 = vmul.f32 %v895, %v728
          %v897 = vmul.f32 %v896, %v895
          %v898 = vmul.f32 0.5, %v897
          %v899 = vsub.f32 1.5, %v898
          %v900 = vmul.f32 %v895, %v899
          %vm901 = vweird.f32 %v728
          %vm902 = vweird.f32 %v895
          %vm903 = vmor %vm901, %vm902
          %v904 = vsel %vm903, %v895, %v900
          %v905 = vsel %vm729, %v754, 0.0
          %v906 = vsel %vm730, %v764, 0.0
          %v907 = vsel %vm731, %v774, 0.0
          %v908 = vsel %vm732, %v784, 0.0
          %v909 = vsel %vm733, %v794, 0.0
          %v910 = vsel %vm734, %v804, 0.0
          %v911 = vsel %vm735, %v814, 0.0
          %v912 = vsel %vm736, %v824, 0.0
          %v913 = vsel %vm737, %v834, 0.0
          %v914 = vsel %vm738, %v844, 0.0
          %v915 = vsel %vm739, %v854, 0.0
          %v916 = vsel %vm740, %v864, 0.0
          %v917 = vsel %vm741, %v874, 0.0
          %v918 = vsel %vm742, %v884, 0.0
          %v919 = vsel %vm743, %v894, 0.0
          %v920 = vsel %vm744, %v904, 0.0
          %v921 = vmul.f32 %v665, %v905
          %v922 = vmul.f32 %v666, %v906
          %v923 = vmul.f32 %v667, %v907
          %v924 = vmul.f32 %v668, %v908
          %v925 = vmul.f32 %v669, %v909
          %v926 = vmul.f32 %v670, %v910
          %v927 = vmul.f32 %v671, %v911
          %v928 = vmul.f32 %v672, %v912
          %v929 = vmul.f32 %v673, %v913
          %v930 = vmul.f32 %v674, %v914
          %v931 = vmul.f32 %v675, %v915
          %v932 = vmul.f32 %v676, %v916
          %v933 = vmul.f32 %v677, %v917
          %v934 = vmul.f32 %v678, %v918
          %v935 = vmul.f32 %v679, %v919
          %v936 = vmul.f32 %v680, %v920
          %937 = vst [vmem:[%s363] sm:$0xff] %v921
          %938 = vst [vmem:[%s363 + $0x8] sm:$0xff] %v922
          %939 = vst [vmem:[%s363 + $0x10] sm:$0xff] %v923
          %940 = vst [vmem:[%s363 + $0x18] sm:$0xff] %v924
          %941 = vst [vmem:[%s363 + $0x20] sm:$0xff] %v925
          %942 = vst [vmem:[%s363 + $0x28] sm:$0xff] %v926
          %943 = vst [vmem:[%s363 + $0x30] sm:$0xff] %v927
          %944 = vst [vmem:[%s363 + $0x38] sm:$0xff] %v928
          %945 = vst [vmem:[%s363 + $0x40] sm:$0xff] %v929
          %946 = vst [vmem:[%s363 + $0x48] sm:$0xff] %v930
          %947 = vst [vmem:[%s363 + $0x50] sm:$0xff] %v931
          %948 = vst [vmem:[%s363 + $0x58] sm:$0xff] %v932
          %949 = vst [vmem:[%s363 + $0x60] sm:$0xff] %v933
          %950 = vst [vmem:[%s363 + $0x68] sm:$0xff] %v934
          %951 = vst [vmem:[%s363 + $0x70] sm:$0xff] %v935
          %952 = vst [vmem:[%s363 + $0x78] sm:$0xff] %v936
        $region85: #{unigin_conv.5} parent=72 // pred_fallthru
          _
        %s953 = smul.u32 16, %s20
        %p954 = scmp.lt.s32.totalorder %s953, 31
        %s955 = scalar_select %p954, %s953, 31
        %s956 = smul.addr %s955, 8
        %s957 = scalar_lea.vmem %s4, %s956
        // Predicated region
        $region86: #{unigin_conv.5} parent=72 // pred_check
          %p958 = pneg %p147
        $region87: #{unigin_conv.5} parent=72 // pred_check_branch
          %960 = sbr.rel (%p958) target = $region89
        $region88: #{unigin_conv.5} parent=72 // pred_region
          %s961 = smul.u32 16, %s20
        $region89: #{unigin_conv.5} parent=72 // pred_fallthru
          _
      $region73: #{unigin_conv.5} parent=5 // pred_fallthru
        _
      %p962 = scmp.le.s32.totalorder 2, %s11
      // Predicated region
      $region90: #{unigin_conv.5} parent=5 // pred_check
        %p963 = pneg %p962
      $region91: #{unigin_conv.5} parent=5 // pred_check_branch
        %965 = sbr.rel (%p963) target = $region93
      $region92: #{unigin_conv.5} parent=5 // pred_region
        %s966 = ssub.s32 %s11, 2
        // Predicated region
        $region94: #{unigin_conv.5} parent=92 // pred_check
          %p967 = pneg %p153
        $region95: #{unigin_conv.5} parent=92 // pred_check_branch
          %969 = sbr.rel (%p967) target = $region97
        $region96: #{unigin_conv.5} parent=92 // pred_region
          %s970 = smul.u32 16, %s22
          %p971 = scmp.lt.s32.totalorder %s970, 31
          %s972 = scalar_select %p971, %s970, 31
          %s973 = smul.addr %s972, 8
          %s974 = scalar_lea.vmem %s4, %s973
        $region97: #{unigin_conv.5} parent=92 // pred_fallthru
          _
      $region93: #{unigin_conv.5} parent=5 // pred_fallthru
        _
    $region6: #{unigin_conv.5} parent=1 // loop_footer
      %s15 = sadd.s32 1, %s11
    $region7: #{unigin_conv.5} parent=1 // loop_footer_branch
      %10 = sbr.rel target = $region3
    $region8: #{unigin_conv.5} parent=1 // loop_exit
      _

</llo_original>
